<compile_context>
chip_gen: v7x
topology: tpu7x:2x2x1
jax: 0.10.0
libtpu: 0.0.40
codegen_flags: <defaults>
</compile_context>

<pallas_src>
import functools

import jax
import jax.numpy as jnp
from jax import lax
from jax.experimental import pallas as pl
from jax.experimental.pallas import tpu as pltpu

# ---------------- configuration (small, consistent with the module) ----------------
D_MODEL = 32          # d_model / d_in
D_INNER = 64          # d_inner / d_hid
N_HEAD = 2
D_K = 16
D_V = 16
CONV_KERNEL = (3, 1)  # conv1d_kernel
CONV_PADDING = (1, 0) # conv1d_padding ("same": required anyway by the residual add)
LN_EPS = 1e-5
NEG_INF = -1e30       # large-negative fill for masked_fill(-inf); exp underflows to 0 in f32


# --------------------------------- kernel helpers -----------------------------------
def _layernorm_rows(x, gamma, beta):
    m = jnp.mean(x, axis=-1, keepdims=True)
    v = jnp.mean((x - m) ** 2, axis=-1, keepdims=True)
    return (x - m) * lax.rsqrt(v + LN_EPS) * gamma + beta


def _conv1d_same(y, w_ref, pos, seg_len, shift_scr):
    """'same' 1-D conv over flattened (n_batch*seg_len, C_in) activations `y`.

    w_ref: (K, C_in, C_out).  Each tap is a full-batch matmul; the row shift for
    off-center taps goes through an 8-row-aligned VMEM scratch (store at offset 8,
    read at offset 8+off), and an iota row-mask re-creates the conv's zero padding
    so taps never leak across batch-segment boundaries.  Rows read outside the
    written window are discarded by the mask, so the scratch needs no zeroing.
    """
    n_rows = y.shape[0]
    ksize = w_ref.shape[0]
    half = (ksize - 1) // 2
    c_out = w_ref.shape[2]
    acc = jnp.zeros((n_rows, c_out), jnp.float32)
    for kk in range(ksize):
        off = kk - half                                   # out[i] += y[i + off] @ w[kk]
        t = jnp.dot(y, w_ref[kk], preferred_element_type=jnp.float32)
        if off == 0:
            acc = acc + t
        else:
            shift_scr[8:8 + n_rows, 0:c_out] = t          # aligned store
            t_sh = shift_scr[8 + off:8 + off + n_rows, 0:c_out]   # row i holds t[i+off]
            valid = jnp.logical_and(pos + off >= 0, pos + off < seg_len)
            acc = acc + jnp.where(valid, t_sh, 0.0)
    return acc


# --------------------------------- Pallas kernel -----------------------------------
def _fft_block_kernel(lens_ref,                       # SMEM scalar prefetch: (B,) int32
                      x_ref, wqkv_ref, bqkv_ref, wo_ref,
                      w1_ref, b1_ref, w2_ref, dvec_ref,
                      *rest,
                      bblk, seq_len, n_head, d_k, d_v, return_attn, attn_dtype):
    if return_attn:
        out_ref, attn_ref, o_scr, shift_scr = rest
    else:
        out_ref, o_scr, shift_scr = rest
        attn_ref = None

    blk = pl.program_id(0)
    n_rows = bblk * seq_len
    hk = n_head * d_k

    x = x_ref[...]                                   # (bblk*S, D) f32
    dvec = dvec_ref[...]                             # (6, D): bo, ln1g, ln1b, b2, ln2g, ln2b
    bo, ln1g, ln1b, b2, ln2g, ln2b = (dvec[r:r + 1, :] for r in range(6))

    # ---- masks rebuilt in-kernel from prefetched lengths (no dense mask DMA) ----
    row = lax.broadcasted_iota(jnp.int32, (n_rows, 1), 0)
    seg = jnp.zeros((n_rows, 1), jnp.int32)          # batch segment index of each row
    for b in range(1, bblk):
        seg = seg + (row >= b * seq_len).astype(jnp.int32)
    pos = row - seg * seq_len                        # position within the sequence
    len_vec = jnp.zeros((n_rows, 1), jnp.int32)
    for b in range(bblk):
        lb = lens_ref[blk * bblk + b]
        len_vec = jnp.where(seg == b, lb, len_vec)
    npm = (pos < len_vec).astype(jnp.float32)        # non_pad_mask, (bblk*S, 1)

    # ---- MultiHeadAttention: fused QKV projection (one MXU push) ----
    qkv = jnp.dot(x, wqkv_ref[...], preferred_element_type=jnp.float32) + bqkv_ref[...]
    wo = wo_ref[...]                                 # (HV, D)

    inv_temp = 1.0 / (d_k ** 0.5)
    key_idx = lax.broadcasted_iota(jnp.int32, (seq_len, seq_len), 1)
    for b in range(bblk):
        lb = lens_ref[blk * bblk + b]
        r0 = b * seq_len
        o_b = jnp.zeros((seq_len, x.shape[1]), jnp.float32)
        for h in range(n_head):
            qh = qkv[r0:r0 + seq_len, h * d_k:(h + 1) * d_k]
            kh = qkv[r0:r0 + seq_len, hk + h * d_k:hk + (h + 1) * d_k]
            vh = qkv[r0:r0 + seq_len, 2 * hk + h * d_v:2 * hk + (h + 1) * d_v]
            s = lax.dot_general(qh, kh, (((1,), (1,)), ((), ())),
                                preferred_element_type=jnp.float32) * inv_temp
            s = jnp.where(key_idx < lb, s, NEG_INF)      # key-pad mask from length
            m = jnp.max(s, axis=-1, keepdims=True)
            p = jnp.exp(s - m)
            attn = p / jnp.sum(p, axis=-1, keepdims=True)
            if return_attn:
                attn_ref[h, b] = attn.astype(attn_dtype)
            head_out = jnp.dot(attn, vh, preferred_element_type=jnp.float32)
            # fold the head concat into the output projection: o += head_out @ wo[h*dv:(h+1)*dv]
            o_b = o_b + jnp.dot(head_out, wo[h * d_v:(h + 1) * d_v, :],
                                preferred_element_type=jnp.float32)
        o_scr[r0:r0 + seq_len, :] = o_b              # aligned sublane store, no lane concat

    o = o_scr[...] + bo
    # dropout -> identity (eval)

    # ---- residual + LayerNorm + non-pad mask (attention block) ----
    y = _layernorm_rows(o + x, ln1g, ln1b) * npm

    # ---- PositionwiseFeedForward: conv1d(K=3) -> relu -> conv1d(K=1) -> residual -> LN ----
    residual = y
    h1 = _conv1d_same(y, w1_ref, pos, seq_len, shift_scr) + b1_ref[...]
    h1 = jnp.maximum(h1, 0.0)
    h2 = _conv1d_same(h1, w2_ref, pos, seq_len, shift_scr) + b2
    # dropout -> identity (eval)
    z = _layernorm_rows(h2 + residual, ln2g, ln2b) * npm
    out_ref[...] = z


# --------------------------------- wrapper ------------------------------------------
def _pick_bblk(batch, max_block=8):
    """Batch elements per grid step: fat steps to amortize per-step overhead, but keep
    >= 2 grid steps when B > 1 so both v7x TensorCores get work (v5e/v6e: serial loop)."""
    if batch <= 1:
        return max(batch, 1)
    cap = max(1, min(max_block, batch // 2))
    for c in range(cap, 0, -1):
        if batch % c == 0:
            return c
    return 1


def fft_block(x, lengths, params, *, return_attn=True):
    """x: (B,S,D) f32; lengths: (B,) int32 valid sequence lengths.

    The key-pad attention mask and the non-pad output mask are built inside the
    kernel from `lengths` (scalar prefetch), so no dense (B,S,S) mask crosses HBM.
    Returns (enc_output (B,S,D) f32, attn (n_head*B,S,S) bf16) or (enc_output, None).
    """
    B, S, D = x.shape
    assert D == D_MODEL
    HK, HV = N_HEAD * D_K, N_HEAD * D_V
    K1, K2 = CONV_KERNEL
    assert CONV_PADDING[0] == (K1 - 1) // 2 and CONV_PADDING[1] == (K2 - 1) // 2

    bblk = _pick_bblk(B)
    nblk = B // bblk
    n_rows = bblk * S

    # ---- host-side parameter packing: fewer, fatter DMAs + fused QKV matmul ----
    w_qkv = jnp.concatenate([params["wq"], params["wk"], params["wv"]], axis=1)  # (D, 2HK+HV)
    b_qkv = jnp.concatenate([params["bq"], params["bk"], params["bv"]], axis=1)  # (1, 2HK+HV)
    dvec = jnp.concatenate([params["bo"], params["ln1g"], params["ln1b"],
                            params["b2"], params["ln2g"], params["ln2b"]], axis=0)  # (6, D)
    x2 = x.reshape(B * S, D)
    lengths = lengths.astype(jnp.int32)

    kernel = functools.partial(
        _fft_block_kernel, bblk=bblk, seq_len=S, n_head=N_HEAD, d_k=D_K, d_v=D_V,
        return_attn=return_attn, attn_dtype=jnp.bfloat16)

    def rep(*shape):  # whole-array (grid-invariant) block
        n = len(shape)
        return pl.BlockSpec(shape, lambda i, lens, n=n: (0,) * n)

    in_specs = [
        pl.BlockSpec((n_rows, D), lambda i, lens: (i, 0)),   # x, flattened (batch*seq, D)
        rep(D, 2 * HK + HV), rep(1, 2 * HK + HV),            # fused QKV weight / bias
        rep(HV, D),                                          # wo
        rep(K1, D, D_INNER), rep(1, D_INNER),                # conv1 w, b
        rep(K2, D_INNER, D),                                 # conv2 w
        rep(6, D),                                           # [bo, ln1g, ln1b, b2, ln2g, ln2b]
    ]
    out_specs = [pl.BlockSpec((n_rows, D), lambda i, lens: (i, 0))]
    out_shape = [jax.ShapeDtypeStruct((B * S, D), jnp.float32)]
    if return_attn:
        out_specs.append(pl.BlockSpec((N_HEAD, bblk, S, S), lambda i, lens: (0, i, 0, 0)))
        out_shape.append(jax.ShapeDtypeStruct((N_HEAD, B, S, S), jnp.bfloat16))

    # advisory cost hint for the XLA scheduler
    flops = 2 * B * S * D * (2 * HK + HV)                       # QKV projection
    flops += 2 * B * N_HEAD * S * S * (D_K + D_V)               # scores + attn @ V
    flops += 2 * B * S * HV * D                                 # output projection
    flops += 2 * B * S * (K1 * D * D_INNER + K2 * D_INNER * D)  # convs
    bytes_accessed = 4 * (2 * B * S * D) + 4 * B
    bytes_accessed += 4 * (w_qkv.size + b_qkv.size + params["wo"].size + params["w1"].size
                           + params["b1"].size + params["w2"].size + dvec.size)
    if return_attn:
        bytes_accessed += 2 * N_HEAD * B * S * S
    cost = pl.CostEstimate(flops=int(flops), transcendentals=int(B * N_HEAD * S * S),
                           bytes_accessed=int(bytes_accessed))

    outs = pl.pallas_call(
        kernel,
        out_shape=out_shape,
        grid_spec=pltpu.PrefetchScalarGridSpec(
            num_scalar_prefetch=1,
            grid=(nblk,),
            in_specs=in_specs,
            out_specs=out_specs,
            scratch_shapes=[
                pltpu.VMEM((n_rows, D), jnp.float32),             # attention-output assembly
                pltpu.VMEM((n_rows + 16, D_INNER), jnp.float32),  # conv row-shift buffer
            ]),
        compiler_params=pltpu.CompilerParams(
            dimension_semantics=("parallel",),
            vmem_limit_bytes=32 * 1024 * 1024),
        cost_estimate=cost,
    )(lengths, x2, w_qkv, b_qkv, params["wo"], params["w1"], params["b1"],
      params["w2"], dvec)

    if return_attn:
        enc, attn = outs
        # torch returns attn with leading dim n_head*B (head-major): attn[h*B + b]
        return enc.reshape(B, S, D), attn.reshape(N_HEAD * B, S, S)
    enc = outs[0]
    return enc.reshape(B, S, D), None


# ----------------------------- pure-JAX reference ------------------------------------
def _layernorm(x, g, b):
    m = jnp.mean(x, -1, keepdims=True)
    v = jnp.mean((x - m) ** 2, -1, keepdims=True)
    return (x - m) * lax.rsqrt(v + LN_EPS) * g + b


def ref_fft_block(x, lengths, P):
    B, S, D = x.shape
    pos = jnp.arange(S)
    valid = (pos[None, :] < lengths[:, None]).astype(jnp.float32)        # (B,S)
    npm = valid[:, :, None]                                              # (B,S,1)
    am = jnp.broadcast_to((1.0 - valid)[:, None, :], (B, S, S))          # 1.0 = masked key

    q = (x @ P["wq"] + P["bq"][0]).reshape(B, S, N_HEAD, D_K).transpose(2, 0, 1, 3)
    k = (x @ P["wk"] + P["bk"][0]).reshape(B, S, N_HEAD, D_K).transpose(2, 0, 1, 3)
    v = (x @ P["wv"] + P["bv"][0]).reshape(B, S, N_HEAD, D_V).transpose(2, 0, 1, 3)
    s = jnp.einsum("hbqd,hbkd->hbqk", q, k) / (D_K ** 0.5)
    s = jnp.where(am[None] > 0.5, NEG_INF, s)
    attn = jax.nn.softmax(s, axis=-1)
    o = jnp.einsum("hbqk,hbkd->hbqd", attn, v).transpose(1, 2, 0, 3).reshape(B, S, N_HEAD * D_V)
    o = o @ P["wo"] + P["bo"][0]
    y = _layernorm(o + x, P["ln1g"][0], P["ln1b"][0]) * npm

    def conv(inp, w, b, pad):
        K = w.shape[0]
        xp = jnp.pad(inp, ((0, 0), (pad, pad), (0, 0)))
        out = jnp.zeros((inp.shape[0], inp.shape[1], w.shape[2]), jnp.float32) + b[0]
        for kk in range(K):
            out = out + jnp.einsum("bsc,cd->bsd", xp[:, kk:kk + inp.shape[1]], w[kk])
        return out

    h1 = jnp.maximum(conv(y, P["w1"], P["b1"], CONV_PADDING[0]), 0.0)
    h2 = conv(h1, P["w2"], P["b2"], CONV_PADDING[1])
    z = _layernorm(h2 + y, P["ln2g"][0], P["ln2b"][0]) * npm
    return z, attn.reshape(N_HEAD * B, S, S)


# ------------------------------------- main ------------------------------------------
if __name__ == "__main__":
    B, S = 4, 8
    HK, HV = N_HEAD * D_K, N_HEAD * D_V
    K1, K2 = CONV_KERNEL

    key = jax.random.PRNGKey(0)
    ks = jax.random.split(key, 16)

    def nrm(k, shape, scale=0.1):
        return scale * jax.random.normal(k, shape, jnp.float32)

    # Synthetic parameters: linear weights stored input-major (x @ W); conv weights (K, Cin, Cout).
    params = {
        "wq": nrm(ks[0], (D_MODEL, HK)), "bq": nrm(ks[1], (1, HK)),
        "wk": nrm(ks[2], (D_MODEL, HK)), "bk": nrm(ks[3], (1, HK)),
        "wv": nrm(ks[4], (D_MODEL, HV)), "bv": nrm(ks[5], (1, HV)),
        "wo": nrm(ks[6], (HV, D_MODEL)), "bo": nrm(ks[7], (1, D_MODEL)),
        "ln1g": jnp.ones((1, D_MODEL), jnp.float32),
        "ln1b": jnp.zeros((1, D_MODEL), jnp.float32),
        "w1": nrm(ks[8], (K1, D_MODEL, D_INNER)), "b1": nrm(ks[9], (1, D_INNER)),
        "w2": nrm(ks[10], (K2, D_INNER, D_MODEL)), "b2": nrm(ks[11], (1, D_MODEL)),
        "ln2g": jnp.ones((1, D_MODEL), jnp.float32),
        "ln2b": jnp.zeros((1, D_MODEL), jnp.float32),
    }

    x = jax.random.normal(ks[12], (B, S, D_MODEL), jnp.float32)
    lengths = jnp.array([8, 6, 8, 3], jnp.int32)   # masks are built in-kernel from these

    out, attn = fft_block(x, lengths, params, return_attn=True)
    out = jax.block_until_ready(out)
    attn = jax.block_until_ready(attn)

    ref_out, ref_attn = ref_fft_block(x, lengths, params)
    assert out.shape == (B, S, D_MODEL) and attn.shape == (N_HEAD * B, S, S)
    assert jnp.max(jnp.abs(out - ref_out)) < 2e-4, "enc_output mismatch vs reference"
    assert jnp.max(jnp.abs(attn.astype(jnp.float32) - ref_attn)) < 1e-2, "attention mismatch vs reference"

    # optional-attention fast path (no (S,S) writeback at all)
    out2, attn2 = fft_block(x, lengths, params, return_attn=False)
    out2 = jax.block_until_ready(out2)
    assert attn2 is None
    assert jnp.max(jnp.abs(out2 - ref_out)) < 2e-4, "enc_output mismatch (no-attn path)"

    print("KERNEL_OK")
</pallas_src>

<mosaic_0001>
module attributes {stable_mosaic.version = 11 : i64} {
  func.func @_fft_block_kernel(%arg0: i32, %arg1: memref<4xi32, #tpu.memory_space<smem>>, %arg2: memref<16x32xf32, #tpu.memory_space<vmem>>, %arg3: memref<32x96xf32, #tpu.memory_space<vmem>>, %arg4: memref<1x96xf32, #tpu.memory_space<vmem>>, %arg5: memref<32x32xf32, #tpu.memory_space<vmem>>, %arg6: memref<3x32x64xf32, #tpu.memory_space<vmem>>, %arg7: memref<1x64xf32, #tpu.memory_space<vmem>>, %arg8: memref<1x64x32xf32, #tpu.memory_space<vmem>>, %arg9: memref<6x32xf32, #tpu.memory_space<vmem>>, %arg10: memref<16x32xf32, #tpu.memory_space<vmem>>, %arg11: memref<2x2x8x8xbf16, #tpu.memory_space<vmem>>, %arg12: memref<16x32xf32, #tpu.memory_space<vmem>>, %arg13: memref<32x64xf32, #tpu.memory_space<vmem>>) attributes {dimension_semantics = [#tpu.dimension_semantics<parallel>], iteration_bounds = array<i64: 2>, scalar_prefetch = 1 : i64, scratch_operands = 2 : i64, tpu.core_type = #tpu.core_type<tc>, window_params = [{transform_indices = @transform_0, window_bounds = array<i64: 16, 32>}, {pipeline_mode = #tpu.pipeline_mode<synchronous>, transform_indices = @transform_1, window_bounds = array<i64: 32, 96>}, {pipeline_mode = #tpu.pipeline_mode<synchronous>, transform_indices = @transform_2, window_bounds = array<i64: 1, 96>}, {pipeline_mode = #tpu.pipeline_mode<synchronous>, transform_indices = @transform_3, window_bounds = array<i64: 32, 32>}, {pipeline_mode = #tpu.pipeline_mode<synchronous>, transform_indices = @transform_4, window_bounds = array<i64: 3, 32, 64>}, {pipeline_mode = #tpu.pipeline_mode<synchronous>, transform_indices = @transform_5, window_bounds = array<i64: 1, 64>}, {pipeline_mode = #tpu.pipeline_mode<synchronous>, transform_indices = @transform_6, window_bounds = array<i64: 1, 64, 32>}, {pipeline_mode = #tpu.pipeline_mode<synchronous>, transform_indices = @transform_7, window_bounds = array<i64: 6, 32>}, {transform_indices = @transform_8, window_bounds = array<i64: 16, 32>}, {transform_indices = @transform_9, window_bounds = array<i64: 2, 2, 8, 8>}]} {
    %c0 = arith.constant 0 : index
    %c0_0 = arith.constant 0 : index
    %0 = vector.load %arg2[%c0, %c0_0] : memref<16x32xf32, #tpu.memory_space<vmem>>, vector<16x32xf32>
    %c0_1 = arith.constant 0 : index
    %c0_2 = arith.constant 0 : index
    %1 = vector.load %arg9[%c0_1, %c0_2] : memref<6x32xf32, #tpu.memory_space<vmem>>, vector<6x32xf32>
    %2 = vector.extract_strided_slice %1 {offsets = [0, 0], sizes = [1, 32], strides = [1, 1]} : vector<6x32xf32> to vector<1x32xf32>
    %3 = vector.extract_strided_slice %1 {offsets = [1, 0], sizes = [1, 32], strides = [1, 1]} : vector<6x32xf32> to vector<1x32xf32>
    %4 = vector.extract_strided_slice %1 {offsets = [2, 0], sizes = [1, 32], strides = [1, 1]} : vector<6x32xf32> to vector<1x32xf32>
    %5 = vector.extract_strided_slice %1 {offsets = [3, 0], sizes = [1, 32], strides = [1, 1]} : vector<6x32xf32> to vector<1x32xf32>
    %6 = vector.extract_strided_slice %1 {offsets = [4, 0], sizes = [1, 32], strides = [1, 1]} : vector<6x32xf32> to vector<1x32xf32>
    %7 = vector.extract_strided_slice %1 {offsets = [5, 0], sizes = [1, 32], strides = [1, 1]} : vector<6x32xf32> to vector<1x32xf32>
    %8 = tpu.iota {dimensions = array<i32: 0>} : vector<16x1xi32>
    %c0_i32 = arith.constant 0 : i32
    %9 = vector.broadcast %c0_i32 : i32 to vector<16x1xi32>
    %c8_i32 = arith.constant 8 : i32
    %10 = vector.broadcast %c8_i32 : i32 to vector<16x1xi32>
    %11 = arith.cmpi sge, %8, %10 : vector<16x1xi32>
    %12 = arith.extui %11 : vector<16x1xi1> to vector<16x1xi32>
    %13 = arith.addi %9, %12 : vector<16x1xi32>
    %c8_i32_3 = arith.constant 8 : i32
    %14 = vector.broadcast %c8_i32_3 : i32 to vector<16x1xi32>
    %15 = arith.muli %13, %14 : vector<16x1xi32>
    %16 = arith.subi %8, %15 : vector<16x1xi32>
    %c0_i32_4 = arith.constant 0 : i32
    %17 = vector.broadcast %c0_i32_4 : i32 to vector<16x1xi32>
    %c2_i32 = arith.constant 2 : i32
    %18 = arith.muli %arg0, %c2_i32 : i32
    %c0_i32_5 = arith.constant 0 : i32
    %19 = arith.addi %18, %c0_i32_5 : i32
    %20 = arith.index_cast %19 : i32 to index
    %21 = memref.load %arg1[%20] : memref<4xi32, #tpu.memory_space<smem>>
    %c0_i32_6 = arith.constant 0 : i32
    %22 = vector.broadcast %c0_i32_6 : i32 to vector<16x1xi32>
    %23 = arith.cmpi eq, %13, %22 : vector<16x1xi32>
    %24 = vector.broadcast %21 : i32 to vector<16x1xi32>
    %25 = arith.select %23, %24, %17 : vector<16x1xi1>, vector<16x1xi32>
    %c2_i32_7 = arith.constant 2 : i32
    %26 = arith.muli %arg0, %c2_i32_7 : i32
    %c1_i32 = arith.constant 1 : i32
    %27 = arith.addi %26, %c1_i32 : i32
    %28 = arith.index_cast %27 : i32 to index
    %29 = memref.load %arg1[%28] : memref<4xi32, #tpu.memory_space<smem>>
    %c1_i32_8 = arith.constant 1 : i32
    %30 = vector.broadcast %c1_i32_8 : i32 to vector<16x1xi32>
    %31 = arith.cmpi eq, %13, %30 : vector<16x1xi32>
    %32 = vector.broadcast %29 : i32 to vector<16x1xi32>
    %33 = arith.select %31, %32, %25 : vector<16x1xi1>, vector<16x1xi32>
    %34 = arith.cmpi slt, %16, %33 : vector<16x1xi32>
    %35 = arith.extui %34 : vector<16x1xi1> to vector<16x1xi32>
    %36 = arith.sitofp %35 : vector<16x1xi32> to vector<16x1xf32>
    %c0_9 = arith.constant 0 : index
    %c0_10 = arith.constant 0 : index
    %37 = vector.load %arg3[%c0_9, %c0_10] : memref<32x96xf32, #tpu.memory_space<vmem>>, vector<32x96xf32>
    %cst = arith.constant dense<0.000000e+00> : vector<16x96xf32>
    %38 = tpu.matmul %0, %37, %cst {dimension_numbers = #tpu.dot_dimension_numbers<[1], [0], [0], [1], [0, 0, 1, 1], [], []>} : vector<16x32xf32>, vector<32x96xf32>, vector<16x96xf32> -> vector<16x96xf32>
    %c0_11 = arith.constant 0 : index
    %c0_12 = arith.constant 0 : index
    %39 = vector.load %arg4[%c0_11, %c0_12] : memref<1x96xf32, #tpu.memory_space<vmem>>, vector<1x96xf32>
    %40 = vector.broadcast %39 : vector<1x96xf32> to vector<16x96xf32>
    %41 = arith.addf %38, %40 : vector<16x96xf32>
    %c0_13 = arith.constant 0 : index
    %c0_14 = arith.constant 0 : index
    %42 = vector.load %arg5[%c0_13, %c0_14] : memref<32x32xf32, #tpu.memory_space<vmem>>, vector<32x32xf32>
    %43 = tpu.iota {dimensions = array<i32: 1>} : vector<8x8xi32>
    %c2_i32_15 = arith.constant 2 : i32
    %44 = arith.muli %arg0, %c2_i32_15 : i32
    %c0_i32_16 = arith.constant 0 : i32
    %45 = arith.addi %44, %c0_i32_16 : i32
    %46 = arith.index_cast %45 : i32 to index
    %47 = memref.load %arg1[%46] : memref<4xi32, #tpu.memory_space<smem>>
    %cst_17 = arith.constant 0.000000e+00 : f32
    %48 = vector.broadcast %cst_17 : f32 to vector<8x32xf32>
    %49 = vector.extract_strided_slice %41 {offsets = [0, 0], sizes = [8, 16], strides = [1, 1]} : vector<16x96xf32> to vector<8x16xf32>
    %50 = vector.extract_strided_slice %41 {offsets = [0, 32], sizes = [8, 16], strides = [1, 1]} : vector<16x96xf32> to vector<8x16xf32>
    %51 = vector.extract_strided_slice %41 {offsets = [0, 64], sizes = [8, 16], strides = [1, 1]} : vector<16x96xf32> to vector<8x16xf32>
    %cst_18 = arith.constant dense<0.000000e+00> : vector<8x8xf32>
    %52 = tpu.matmul %49, %50, %cst_18 {dimension_numbers = #tpu.dot_dimension_numbers<[1], [1], [0], [0], [0, 0, 1, 0], [], []>} : vector<8x16xf32>, vector<8x16xf32>, vector<8x8xf32> -> vector<8x8xf32>
    %cst_19 = arith.constant 2.500000e-01 : f32
    %53 = vector.broadcast %cst_19 : f32 to vector<8x8xf32>
    %54 = arith.mulf %52, %53 : vector<8x8xf32>
    %55 = vector.broadcast %47 : i32 to vector<8x8xi32>
    %56 = arith.cmpi slt, %43, %55 : vector<8x8xi32>
    %cst_20 = arith.constant -1.000000e+30 : f32
    %57 = vector.broadcast %cst_20 : f32 to vector<8x8xf32>
    %58 = arith.select %56, %54, %57 : vector<8x8xi1>, vector<8x8xf32>
    %cst_21 = arith.constant dense<0xFF800000> : vector<8xf32>
    %59 = vector.multi_reduction <maximumf>, %58, %cst_21 [1] : vector<8x8xf32> to vector<8xf32>
    %60 = vector.shape_cast %59 : vector<8xf32> to vector<8x1xf32>
    %61 = vector.broadcast %60 : vector<8x1xf32> to vector<8x8xf32>
    %62 = arith.subf %58, %61 : vector<8x8xf32>
    %63 = math.exp %62 : vector<8x8xf32>
    %cst_22 = arith.constant dense<0.000000e+00> : vector<8xf32>
    %64 = vector.multi_reduction <add>, %63, %cst_22 [1] : vector<8x8xf32> to vector<8xf32>
    %65 = vector.shape_cast %64 : vector<8xf32> to vector<8x1xf32>
    %66 = vector.broadcast %65 : vector<8x1xf32> to vector<8x8xf32>
    %67 = arith.divf %63, %66 : vector<8x8xf32>
    %68 = arith.truncf %67 : vector<8x8xf32> to vector<8x8xbf16>
    %c0_23 = arith.constant 0 : index
    %c0_24 = arith.constant 0 : index
    %c0_25 = arith.constant 0 : index
    %c0_26 = arith.constant 0 : index
    %69 = vector.load %arg11[%c0_23, %c0_24, %c0_25, %c0_26] : memref<2x2x8x8xbf16, #tpu.memory_space<vmem>>, vector<1x1x8x8xbf16>
    %70 = vector.shape_cast %69 : vector<1x1x8x8xbf16> to vector<8x8xbf16>
    %71 = vector.shape_cast %68 : vector<8x8xbf16> to vector<1x1x8x8xbf16>
    tpu.vector_store %arg11[%c0_23, %c0_24, %c0_25, %c0_26], %71 {strides = array<i32>} : memref<2x2x8x8xbf16, #tpu.memory_space<vmem>>, vector<1x1x8x8xbf16>,
    %cst_27 = arith.constant dense<0.000000e+00> : vector<8x16xf32>
    %72 = tpu.matmul %67, %51, %cst_27 {dimension_numbers = #tpu.dot_dimension_numbers<[1], [0], [0], [1], [0, 0, 1, 1], [], []>} : vector<8x8xf32>, vector<8x16xf32>, vector<8x16xf32> -> vector<8x16xf32>
    %73 = vector.extract_strided_slice %42 {offsets = [0, 0], sizes = [16, 32], strides = [1, 1]} : vector<32x32xf32> to vector<16x32xf32>
    %cst_28 = arith.constant dense<0.000000e+00> : vector<8x32xf32>
    %74 = tpu.matmul %72, %73, %cst_28 {dimension_numbers = #tpu.dot_dimension_numbers<[1], [0], [0], [1], [0, 0, 1, 1], [], []>} : vector<8x16xf32>, vector<16x32xf32>, vector<8x32xf32> -> vector<8x32xf32>
    %75 = arith.addf %48, %74 : vector<8x32xf32>
    %76 = vector.extract_strided_slice %41 {offsets = [0, 16], sizes = [8, 16], strides = [1, 1]} : vector<16x96xf32> to vector<8x16xf32>
    %77 = vector.extract_strided_slice %41 {offsets = [0, 48], sizes = [8, 16], strides = [1, 1]} : vector<16x96xf32> to vector<8x16xf32>
    %78 = vector.extract_strided_slice %41 {offsets = [0, 80], sizes = [8, 16], strides = [1, 1]} : vector<16x96xf32> to vector<8x16xf32>
    %cst_29 = arith.constant dense<0.000000e+00> : vector<8x8xf32>
    %79 = tpu.matmul %76, %77, %cst_29 {dimension_numbers = #tpu.dot_dimension_numbers<[1], [1], [0], [0], [0, 0, 1, 0], [], []>} : vector<8x16xf32>, vector<8x16xf32>, vector<8x8xf32> -> vector<8x8xf32>
    %cst_30 = arith.constant 2.500000e-01 : f32
    %80 = vector.broadcast %cst_30 : f32 to vector<8x8xf32>
    %81 = arith.mulf %79, %80 : vector<8x8xf32>
    %82 = vector.broadcast %47 : i32 to vector<8x8xi32>
    %83 = arith.cmpi slt, %43, %82 : vector<8x8xi32>
    %cst_31 = arith.constant -1.000000e+30 : f32
    %84 = vector.broadcast %cst_31 : f32 to vector<8x8xf32>
    %85 = arith.select %83, %81, %84 : vector<8x8xi1>, vector<8x8xf32>
    %cst_32 = arith.constant dense<0xFF800000> : vector<8xf32>
    %86 = vector.multi_reduction <maximumf>, %85, %cst_32 [1] : vector<8x8xf32> to vector<8xf32>
    %87 = vector.shape_cast %86 : vector<8xf32> to vector<8x1xf32>
    %88 = vector.broadcast %87 : vector<8x1xf32> to vector<8x8xf32>
    %89 = arith.subf %85, %88 : vector<8x8xf32>
    %90 = math.exp %89 : vector<8x8xf32>
    %cst_33 = arith.constant dense<0.000000e+00> : vector<8xf32>
    %91 = vector.multi_reduction <add>, %90, %cst_33 [1] : vector<8x8xf32> to vector<8xf32>
    %92 = vector.shape_cast %91 : vector<8xf32> to vector<8x1xf32>
    %93 = vector.broadcast %92 : vector<8x1xf32> to vector<8x8xf32>
    %94 = arith.divf %90, %93 : vector<8x8xf32>
    %95 = arith.truncf %94 : vector<8x8xf32> to vector<8x8xbf16>
    %c1 = arith.constant 1 : index
    %c0_34 = arith.constant 0 : index
    %c0_35 = arith.constant 0 : index
    %c0_36 = arith.constant 0 : index
    %96 = vector.load %arg11[%c1, %c0_34, %c0_35, %c0_36] : memref<2x2x8x8xbf16, #tpu.memory_space<vmem>>, vector<1x1x8x8xbf16>
    %97 = vector.shape_cast %96 : vector<1x1x8x8xbf16> to vector<8x8xbf16>
    %98 = vector.shape_cast %95 : vector<8x8xbf16> to vector<1x1x8x8xbf16>
    tpu.vector_store %arg11[%c1, %c0_34, %c0_35, %c0_36], %98 {strides = array<i32>} : memref<2x2x8x8xbf16, #tpu.memory_space<vmem>>, vector<1x1x8x8xbf16>,
    %cst_37 = arith.constant dense<0.000000e+00> : vector<8x16xf32>
    %99 = tpu.matmul %94, %78, %cst_37 {dimension_numbers = #tpu.dot_dimension_numbers<[1], [0], [0], [1], [0, 0, 1, 1], [], []>} : vector<8x8xf32>, vector<8x16xf32>, vector<8x16xf32> -> vector<8x16xf32>
    %100 = vector.extract_strided_slice %42 {offsets = [16, 0], sizes = [16, 32], strides = [1, 1]} : vector<32x32xf32> to vector<16x32xf32>
    %cst_38 = arith.constant dense<0.000000e+00> : vector<8x32xf32>
    %101 = tpu.matmul %99, %100, %cst_38 {dimension_numbers = #tpu.dot_dimension_numbers<[1], [0], [0], [1], [0, 0, 1, 1], [], []>} : vector<8x16xf32>, vector<16x32xf32>, vector<8x32xf32> -> vector<8x32xf32>
    %102 = arith.addf %75, %101 : vector<8x32xf32>
    %c0_39 = arith.constant 0 : index
    %c0_40 = arith.constant 0 : index
    %103 = vector.load %arg12[%c0_39, %c0_40] : memref<16x32xf32, #tpu.memory_space<vmem>>, vector<8x32xf32>
    tpu.vector_store %arg12[%c0_39, %c0_40], %102 {strides = array<i32>} : memref<16x32xf32, #tpu.memory_space<vmem>>, vector<8x32xf32>,
    %c2_i32_41 = arith.constant 2 : i32
    %104 = arith.muli %arg0, %c2_i32_41 : i32
    %c1_i32_42 = arith.constant 1 : i32
    %105 = arith.addi %104, %c1_i32_42 : i32
    %106 = arith.index_cast %105 : i32 to index
    %107 = memref.load %arg1[%106] : memref<4xi32, #tpu.memory_space<smem>>
    %cst_43 = arith.constant 0.000000e+00 : f32
    %108 = vector.broadcast %cst_43 : f32 to vector<8x32xf32>
    %109 = vector.extract_strided_slice %41 {offsets = [8, 0], sizes = [8, 16], strides = [1, 1]} : vector<16x96xf32> to vector<8x16xf32>
    %110 = vector.extract_strided_slice %41 {offsets = [8, 32], sizes = [8, 16], strides = [1, 1]} : vector<16x96xf32> to vector<8x16xf32>
    %111 = vector.extract_strided_slice %41 {offsets = [8, 64], sizes = [8, 16], strides = [1, 1]} : vector<16x96xf32> to vector<8x16xf32>
    %cst_44 = arith.constant dense<0.000000e+00> : vector<8x8xf32>
    %112 = tpu.matmul %109, %110, %cst_44 {dimension_numbers = #tpu.dot_dimension_numbers<[1], [1], [0], [0], [0, 0, 1, 0], [], []>} : vector<8x16xf32>, vector<8x16xf32>, vector<8x8xf32> -> vector<8x8xf32>
    %cst_45 = arith.constant 2.500000e-01 : f32
    %113 = vector.broadcast %cst_45 : f32 to vector<8x8xf32>
    %114 = arith.mulf %112, %113 : vector<8x8xf32>
    %115 = vector.broadcast %107 : i32 to vector<8x8xi32>
    %116 = arith.cmpi slt, %43, %115 : vector<8x8xi32>
    %cst_46 = arith.constant -1.000000e+30 : f32
    %117 = vector.broadcast %cst_46 : f32 to vector<8x8xf32>
    %118 = arith.select %116, %114, %117 : vector<8x8xi1>, vector<8x8xf32>
    %cst_47 = arith.constant dense<0xFF800000> : vector<8xf32>
    %119 = vector.multi_reduction <maximumf>, %118, %cst_47 [1] : vector<8x8xf32> to vector<8xf32>
    %120 = vector.shape_cast %119 : vector<8xf32> to vector<8x1xf32>
    %121 = vector.broadcast %120 : vector<8x1xf32> to vector<8x8xf32>
    %122 = arith.subf %118, %121 : vector<8x8xf32>
    %123 = math.exp %122 : vector<8x8xf32>
    %cst_48 = arith.constant dense<0.000000e+00> : vector<8xf32>
    %124 = vector.multi_reduction <add>, %123, %cst_48 [1] : vector<8x8xf32> to vector<8xf32>
    %125 = vector.shape_cast %124 : vector<8xf32> to vector<8x1xf32>
    %126 = vector.broadcast %125 : vector<8x1xf32> to vector<8x8xf32>
    %127 = arith.divf %123, %126 : vector<8x8xf32>
    %128 = arith.truncf %127 : vector<8x8xf32> to vector<8x8xbf16>
    %c0_49 = arith.constant 0 : index
    %c1_50 = arith.constant 1 : index
    %c0_51 = arith.constant 0 : index
    %c0_52 = arith.constant 0 : index
    %129 = vector.load %arg11[%c0_49, %c1_50, %c0_51, %c0_52] : memref<2x2x8x8xbf16, #tpu.memory_space<vmem>>, vector<1x1x8x8xbf16>
    %130 = vector.shape_cast %129 : vector<1x1x8x8xbf16> to vector<8x8xbf16>
    %131 = vector.shape_cast %128 : vector<8x8xbf16> to vector<1x1x8x8xbf16>
    tpu.vector_store %arg11[%c0_49, %c1_50, %c0_51, %c0_52], %131 {strides = array<i32>} : memref<2x2x8x8xbf16, #tpu.memory_space<vmem>>, vector<1x1x8x8xbf16>,
    %cst_53 = arith.constant dense<0.000000e+00> : vector<8x16xf32>
    %132 = tpu.matmul %127, %111, %cst_53 {dimension_numbers = #tpu.dot_dimension_numbers<[1], [0], [0], [1], [0, 0, 1, 1], [], []>} : vector<8x8xf32>, vector<8x16xf32>, vector<8x16xf32> -> vector<8x16xf32>
    %133 = vector.extract_strided_slice %42 {offsets = [0, 0], sizes = [16, 32], strides = [1, 1]} : vector<32x32xf32> to vector<16x32xf32>
    %cst_54 = arith.constant dense<0.000000e+00> : vector<8x32xf32>
    %134 = tpu.matmul %132, %133, %cst_54 {dimension_numbers = #tpu.dot_dimension_numbers<[1], [0], [0], [1], [0, 0, 1, 1], [], []>} : vector<8x16xf32>, vector<16x32xf32>, vector<8x32xf32> -> vector<8x32xf32>
    %135 = arith.addf %108, %134 : vector<8x32xf32>
    %136 = vector.extract_strided_slice %41 {offsets = [8, 16], sizes = [8, 16], strides = [1, 1]} : vector<16x96xf32> to vector<8x16xf32>
    %137 = vector.extract_strided_slice %41 {offsets = [8, 48], sizes = [8, 16], strides = [1, 1]} : vector<16x96xf32> to vector<8x16xf32>
    %138 = vector.extract_strided_slice %41 {offsets = [8, 80], sizes = [8, 16], strides = [1, 1]} : vector<16x96xf32> to vector<8x16xf32>
    %cst_55 = arith.constant dense<0.000000e+00> : vector<8x8xf32>
    %139 = tpu.matmul %136, %137, %cst_55 {dimension_numbers = #tpu.dot_dimension_numbers<[1], [1], [0], [0], [0, 0, 1, 0], [], []>} : vector<8x16xf32>, vector<8x16xf32>, vector<8x8xf32> -> vector<8x8xf32>
    %cst_56 = arith.constant 2.500000e-01 : f32
    %140 = vector.broadcast %cst_56 : f32 to vector<8x8xf32>
    %141 = arith.mulf %139, %140 : vector<8x8xf32>
    %142 = vector.broadcast %107 : i32 to vector<8x8xi32>
    %143 = arith.cmpi slt, %43, %142 : vector<8x8xi32>
    %cst_57 = arith.constant -1.000000e+30 : f32
    %144 = vector.broadcast %cst_57 : f32 to vector<8x8xf32>
    %145 = arith.select %143, %141, %144 : vector<8x8xi1>, vector<8x8xf32>
    %cst_58 = arith.constant dense<0xFF800000> : vector<8xf32>
    %146 = vector.multi_reduction <maximumf>, %145, %cst_58 [1] : vector<8x8xf32> to vector<8xf32>
    %147 = vector.shape_cast %146 : vector<8xf32> to vector<8x1xf32>
    %148 = vector.broadcast %147 : vector<8x1xf32> to vector<8x8xf32>
    %149 = arith.subf %145, %148 : vector<8x8xf32>
    %150 = math.exp %149 : vector<8x8xf32>
    %cst_59 = arith.constant dense<0.000000e+00> : vector<8xf32>
    %151 = vector.multi_reduction <add>, %150, %cst_59 [1] : vector<8x8xf32> to vector<8xf32>
    %152 = vector.shape_cast %151 : vector<8xf32> to vector<8x1xf32>
    %153 = vector.broadcast %152 : vector<8x1xf32> to vector<8x8xf32>
    %154 = arith.divf %150, %153 : vector<8x8xf32>
    %155 = arith.truncf %154 : vector<8x8xf32> to vector<8x8xbf16>
    %c1_60 = arith.constant 1 : index
    %c1_61 = arith.constant 1 : index
    %c0_62 = arith.constant 0 : index
    %c0_63 = arith.constant 0 : index
    %156 = vector.load %arg11[%c1_60, %c1_61, %c0_62, %c0_63] : memref<2x2x8x8xbf16, #tpu.memory_space<vmem>>, vector<1x1x8x8xbf16>
    %157 = vector.shape_cast %156 : vector<1x1x8x8xbf16> to vector<8x8xbf16>
    %158 = vector.shape_cast %155 : vector<8x8xbf16> to vector<1x1x8x8xbf16>
    tpu.vector_store %arg11[%c1_60, %c1_61, %c0_62, %c0_63], %158 {strides = array<i32>} : memref<2x2x8x8xbf16, #tpu.memory_space<vmem>>, vector<1x1x8x8xbf16>,
    %cst_64 = arith.constant dense<0.000000e+00> : vector<8x16xf32>
    %159 = tpu.matmul %154, %138, %cst_64 {dimension_numbers = #tpu.dot_dimension_numbers<[1], [0], [0], [1], [0, 0, 1, 1], [], []>} : vector<8x8xf32>, vector<8x16xf32>, vector<8x16xf32> -> vector<8x16xf32>
    %160 = vector.extract_strided_slice %42 {offsets = [16, 0], sizes = [16, 32], strides = [1, 1]} : vector<32x32xf32> to vector<16x32xf32>
    %cst_65 = arith.constant dense<0.000000e+00> : vector<8x32xf32>
    %161 = tpu.matmul %159, %160, %cst_65 {dimension_numbers = #tpu.dot_dimension_numbers<[1], [0], [0], [1], [0, 0, 1, 1], [], []>} : vector<8x16xf32>, vector<16x32xf32>, vector<8x32xf32> -> vector<8x32xf32>
    %162 = arith.addf %135, %161 : vector<8x32xf32>
    %c8 = arith.constant 8 : index
    %c0_66 = arith.constant 0 : index
    %163 = vector.load %arg12[%c8, %c0_66] : memref<16x32xf32, #tpu.memory_space<vmem>>, vector<8x32xf32>
    tpu.vector_store %arg12[%c8, %c0_66], %162 {strides = array<i32>} : memref<16x32xf32, #tpu.memory_space<vmem>>, vector<8x32xf32>,
    %c0_67 = arith.constant 0 : index
    %c0_68 = arith.constant 0 : index
    %164 = vector.load %arg12[%c0_67, %c0_68] : memref<16x32xf32, #tpu.memory_space<vmem>>, vector<16x32xf32>
    %165 = vector.broadcast %2 : vector<1x32xf32> to vector<16x32xf32>
    %166 = arith.addf %164, %165 : vector<16x32xf32>
    %167 = arith.addf %166, %0 : vector<16x32xf32>
    %cst_69 = arith.constant dense<0.000000e+00> : vector<16xf32>
    %168 = vector.multi_reduction <add>, %167, %cst_69 [1] : vector<16x32xf32> to vector<16xf32>
    %169 = vector.shape_cast %168 : vector<16xf32> to vector<16x1xf32>
    %cst_70 = arith.constant 3.200000e+01 : f32
    %170 = vector.broadcast %cst_70 : f32 to vector<16x1xf32>
    %171 = arith.divf %169, %170 : vector<16x1xf32>
    %172 = vector.broadcast %171 : vector<16x1xf32> to vector<16x32xf32>
    %173 = arith.subf %167, %172 : vector<16x32xf32>
    %174 = arith.mulf %173, %173 : vector<16x32xf32>
    %cst_71 = arith.constant dense<0.000000e+00> : vector<16xf32>
    %175 = vector.multi_reduction <add>, %174, %cst_71 [1] : vector<16x32xf32> to vector<16xf32>
    %176 = vector.shape_cast %175 : vector<16xf32> to vector<16x1xf32>
    %cst_72 = arith.constant 3.200000e+01 : f32
    %177 = vector.broadcast %cst_72 : f32 to vector<16x1xf32>
    %178 = arith.divf %176, %177 : vector<16x1xf32>
    %179 = vector.broadcast %171 : vector<16x1xf32> to vector<16x32xf32>
    %180 = arith.subf %167, %179 : vector<16x32xf32>
    %cst_73 = arith.constant 9.99999974E-6 : f32
    %181 = vector.broadcast %cst_73 : f32 to vector<16x1xf32>
    %182 = arith.addf %178, %181 : vector<16x1xf32>
    %183 = math.rsqrt %182 : vector<16x1xf32>
    %184 = vector.broadcast %183 : vector<16x1xf32> to vector<16x32xf32>
    %185 = arith.mulf %180, %184 : vector<16x32xf32>
    %186 = vector.broadcast %3 : vector<1x32xf32> to vector<16x32xf32>
    %187 = arith.mulf %185, %186 : vector<16x32xf32>
    %188 = vector.broadcast %4 : vector<1x32xf32> to vector<16x32xf32>
    %189 = arith.addf %187, %188 : vector<16x32xf32>
    %190 = vector.broadcast %36 : vector<16x1xf32> to vector<16x32xf32>
    %191 = arith.mulf %189, %190 : vector<16x32xf32>
    %cst_74 = arith.constant 0.000000e+00 : f32
    %192 = vector.broadcast %cst_74 : f32 to vector<16x64xf32>
    %c0_75 = arith.constant 0 : index
    %c0_76 = arith.constant 0 : index
    %c0_77 = arith.constant 0 : index
    %193 = vector.load %arg6[%c0_75, %c0_76, %c0_77] : memref<3x32x64xf32, #tpu.memory_space<vmem>>, vector<1x32x64xf32>
    %194 = vector.shape_cast %193 : vector<1x32x64xf32> to vector<32x64xf32>
    %cst_78 = arith.constant dense<0.000000e+00> : vector<16x64xf32>
    %195 = tpu.matmul %191, %194, %cst_78 {dimension_numbers = #tpu.dot_dimension_numbers<[1], [0], [0], [1], [0, 0, 1, 1], [], []>} : vector<16x32xf32>, vector<32x64xf32>, vector<16x64xf32> -> vector<16x64xf32>
    %c8_79 = arith.constant 8 : index
    %c0_80 = arith.constant 0 : index
    %196 = vector.load %arg13[%c8_79, %c0_80] : memref<32x64xf32, #tpu.memory_space<vmem>>, vector<16x64xf32>
    tpu.vector_store %arg13[%c8_79, %c0_80], %195 {strides = array<i32>} : memref<32x64xf32, #tpu.memory_space<vmem>>, vector<16x64xf32>,
    %c7 = arith.constant 7 : index
    %c0_81 = arith.constant 0 : index
    %197 = vector.load %arg13[%c7, %c0_81] : memref<32x64xf32, #tpu.memory_space<vmem>>, vector<16x64xf32>
    %c-1_i32 = arith.constant -1 : i32
    %198 = vector.broadcast %c-1_i32 : i32 to vector<16x1xi32>
    %199 = arith.addi %16, %198 : vector<16x1xi32>
    %c0_i32_82 = arith.constant 0 : i32
    %200 = vector.broadcast %c0_i32_82 : i32 to vector<16x1xi32>
    %201 = arith.cmpi sge, %199, %200 : vector<16x1xi32>
    %c-1_i32_83 = arith.constant -1 : i32
    %202 = vector.broadcast %c-1_i32_83 : i32 to vector<16x1xi32>
    %203 = arith.addi %16, %202 : vector<16x1xi32>
    %c8_i32_84 = arith.constant 8 : i32
    %204 = vector.broadcast %c8_i32_84 : i32 to vector<16x1xi32>
    %205 = arith.cmpi slt, %203, %204 : vector<16x1xi32>
    %206 = arith.andi %201, %205 : vector<16x1xi1>
    %cst_85 = arith.constant 0.000000e+00 : f32
    %207 = vector.shape_cast %206 : vector<16x1xi1> to vector<16x1xi1>
    %208 = vector.broadcast %207 : vector<16x1xi1> to vector<16x64xi1>
    %209 = vector.broadcast %cst_85 : f32 to vector<16x64xf32>
    %210 = arith.select %208, %197, %209 : vector<16x64xi1>, vector<16x64xf32>
    %211 = arith.addf %192, %210 : vector<16x64xf32>
    %c1_86 = arith.constant 1 : index
    %c0_87 = arith.constant 0 : index
    %c0_88 = arith.constant 0 : index
    %212 = vector.load %arg6[%c1_86, %c0_87, %c0_88] : memref<3x32x64xf32, #tpu.memory_space<vmem>>, vector<1x32x64xf32>
    %213 = vector.shape_cast %212 : vector<1x32x64xf32> to vector<32x64xf32>
    %cst_89 = arith.constant dense<0.000000e+00> : vector<16x64xf32>
    %214 = tpu.matmul %191, %213, %cst_89 {dimension_numbers = #tpu.dot_dimension_numbers<[1], [0], [0], [1], [0, 0, 1, 1], [], []>} : vector<16x32xf32>, vector<32x64xf32>, vector<16x64xf32> -> vector<16x64xf32>
    %215 = arith.addf %211, %214 : vector<16x64xf32>
    %c2 = arith.constant 2 : index
    %c0_90 = arith.constant 0 : index
    %c0_91 = arith.constant 0 : index
    %216 = vector.load %arg6[%c2, %c0_90, %c0_91] : memref<3x32x64xf32, #tpu.memory_space<vmem>>, vector<1x32x64xf32>
    %217 = vector.shape_cast %216 : vector<1x32x64xf32> to vector<32x64xf32>
    %cst_92 = arith.constant dense<0.000000e+00> : vector<16x64xf32>
    %218 = tpu.matmul %191, %217, %cst_92 {dimension_numbers = #tpu.dot_dimension_numbers<[1], [0], [0], [1], [0, 0, 1, 1], [], []>} : vector<16x32xf32>, vector<32x64xf32>, vector<16x64xf32> -> vector<16x64xf32>
    %c8_93 = arith.constant 8 : index
    %c0_94 = arith.constant 0 : index
    %219 = vector.load %arg13[%c8_93, %c0_94] : memref<32x64xf32, #tpu.memory_space<vmem>>, vector<16x64xf32>
    tpu.vector_store %arg13[%c8_93, %c0_94], %218 {strides = array<i32>} : memref<32x64xf32, #tpu.memory_space<vmem>>, vector<16x64xf32>,
    %c9 = arith.constant 9 : index
    %c0_95 = arith.constant 0 : index
    %220 = vector.load %arg13[%c9, %c0_95] : memref<32x64xf32, #tpu.memory_space<vmem>>, vector<16x64xf32>
    %c1_i32_96 = arith.constant 1 : i32
    %221 = vector.broadcast %c1_i32_96 : i32 to vector<16x1xi32>
    %222 = arith.addi %16, %221 : vector<16x1xi32>
    %c0_i32_97 = arith.constant 0 : i32
    %223 = vector.broadcast %c0_i32_97 : i32 to vector<16x1xi32>
    %224 = arith.cmpi sge, %222, %223 : vector<16x1xi32>
    %c1_i32_98 = arith.constant 1 : i32
    %225 = vector.broadcast %c1_i32_98 : i32 to vector<16x1xi32>
    %226 = arith.addi %16, %225 : vector<16x1xi32>
    %c8_i32_99 = arith.constant 8 : i32
    %227 = vector.broadcast %c8_i32_99 : i32 to vector<16x1xi32>
    %228 = arith.cmpi slt, %226, %227 : vector<16x1xi32>
    %229 = arith.andi %224, %228 : vector<16x1xi1>
    %cst_100 = arith.constant 0.000000e+00 : f32
    %230 = vector.shape_cast %229 : vector<16x1xi1> to vector<16x1xi1>
    %231 = vector.broadcast %230 : vector<16x1xi1> to vector<16x64xi1>
    %232 = vector.broadcast %cst_100 : f32 to vector<16x64xf32>
    %233 = arith.select %231, %220, %232 : vector<16x64xi1>, vector<16x64xf32>
    %234 = arith.addf %215, %233 : vector<16x64xf32>
    %c0_101 = arith.constant 0 : index
    %c0_102 = arith.constant 0 : index
    %235 = vector.load %arg7[%c0_101, %c0_102] : memref<1x64xf32, #tpu.memory_space<vmem>>, vector<1x64xf32>
    %236 = vector.broadcast %235 : vector<1x64xf32> to vector<16x64xf32>
    %237 = arith.addf %234, %236 : vector<16x64xf32>
    %cst_103 = arith.constant 0.000000e+00 : f32
    %238 = vector.broadcast %cst_103 : f32 to vector<16x64xf32>
    %239 = arith.maximumf %237, %238 : vector<16x64xf32>
    %cst_104 = arith.constant 0.000000e+00 : f32
    %240 = vector.broadcast %cst_104 : f32 to vector<16x32xf32>
    %c0_105 = arith.constant 0 : index
    %c0_106 = arith.constant 0 : index
    %c0_107 = arith.constant 0 : index
    %241 = vector.load %arg8[%c0_105, %c0_106, %c0_107] : memref<1x64x32xf32, #tpu.memory_space<vmem>>, vector<1x64x32xf32>
    %242 = vector.shape_cast %241 : vector<1x64x32xf32> to vector<64x32xf32>
    %cst_108 = arith.constant dense<0.000000e+00> : vector<16x32xf32>
    %243 = tpu.matmul %239, %242, %cst_108 {dimension_numbers = #tpu.dot_dimension_numbers<[1], [0], [0], [1], [0, 0, 1, 1], [], []>} : vector<16x64xf32>, vector<64x32xf32>, vector<16x32xf32> -> vector<16x32xf32>
    %244 = arith.addf %240, %243 : vector<16x32xf32>
    %245 = vector.broadcast %5 : vector<1x32xf32> to vector<16x32xf32>
    %246 = arith.addf %244, %245 : vector<16x32xf32>
    %247 = arith.addf %246, %191 : vector<16x32xf32>
    %cst_109 = arith.constant dense<0.000000e+00> : vector<16xf32>
    %248 = vector.multi_reduction <add>, %247, %cst_109 [1] : vector<16x32xf32> to vector<16xf32>
    %249 = vector.shape_cast %248 : vector<16xf32> to vector<16x1xf32>
    %cst_110 = arith.constant 3.200000e+01 : f32
    %250 = vector.broadcast %cst_110 : f32 to vector<16x1xf32>
    %251 = arith.divf %249, %250 : vector<16x1xf32>
    %252 = vector.broadcast %251 : vector<16x1xf32> to vector<16x32xf32>
    %253 = arith.subf %247, %252 : vector<16x32xf32>
    %254 = arith.mulf %253, %253 : vector<16x32xf32>
    %cst_111 = arith.constant dense<0.000000e+00> : vector<16xf32>
    %255 = vector.multi_reduction <add>, %254, %cst_111 [1] : vector<16x32xf32> to vector<16xf32>
    %256 = vector.shape_cast %255 : vector<16xf32> to vector<16x1xf32>
    %cst_112 = arith.constant 3.200000e+01 : f32
    %257 = vector.broadcast %cst_112 : f32 to vector<16x1xf32>
    %258 = arith.divf %256, %257 : vector<16x1xf32>
    %259 = vector.broadcast %251 : vector<16x1xf32> to vector<16x32xf32>
    %260 = arith.subf %247, %259 : vector<16x32xf32>
    %cst_113 = arith.constant 9.99999974E-6 : f32
    %261 = vector.broadcast %cst_113 : f32 to vector<16x1xf32>
    %262 = arith.addf %258, %261 : vector<16x1xf32>
    %263 = math.rsqrt %262 : vector<16x1xf32>
    %264 = vector.broadcast %263 : vector<16x1xf32> to vector<16x32xf32>
    %265 = arith.mulf %260, %264 : vector<16x32xf32>
    %266 = vector.broadcast %6 : vector<1x32xf32> to vector<16x32xf32>
    %267 = arith.mulf %265, %266 : vector<16x32xf32>
    %268 = vector.broadcast %7 : vector<1x32xf32> to vector<16x32xf32>
    %269 = arith.addf %267, %268 : vector<16x32xf32>
    %270 = vector.broadcast %36 : vector<16x1xf32> to vector<16x32xf32>
    %271 = arith.mulf %269, %270 : vector<16x32xf32>
    %c0_114 = arith.constant 0 : index
    %c0_115 = arith.constant 0 : index
    %272 = vector.load %arg10[%c0_114, %c0_115] : memref<16x32xf32, #tpu.memory_space<vmem>>, vector<16x32xf32>
    tpu.vector_store %arg10[%c0_114, %c0_115], %271 {strides = array<i32>} : memref<16x32xf32, #tpu.memory_space<vmem>>, vector<16x32xf32>,
    return
  }
  func.func @transform_0(%arg0: i32, %arg1: memref<4xi32, #tpu.memory_space<smem>>) -> (i32, i32) {
    %c0_i32 = arith.constant 0 : i32
    %c0_i32_0 = arith.constant 0 : i32
    return %arg0, %c0_i32 : i32, i32
  }
  func.func @transform_1(%arg0: i32, %arg1: memref<4xi32, #tpu.memory_space<smem>>) -> (i32, i32) {
    %c0_i32 = arith.constant 0 : i32
    %c0_i32_0 = arith.constant 0 : i32
    %c0_i32_1 = arith.constant 0 : i32
    return %c0_i32, %c0_i32_0 : i32, i32
  }
  func.func @transform_2(%arg0: i32, %arg1: memref<4xi32, #tpu.memory_space<smem>>) -> (i32, i32) {
    %c0_i32 = arith.constant 0 : i32
    %c0_i32_0 = arith.constant 0 : i32
    %c0_i32_1 = arith.constant 0 : i32
    return %c0_i32, %c0_i32_0 : i32, i32
  }
  func.func @transform_3(%arg0: i32, %arg1: memref<4xi32, #tpu.memory_space<smem>>) -> (i32, i32) {
    %c0_i32 = arith.constant 0 : i32
    %c0_i32_0 = arith.constant 0 : i32
    %c0_i32_1 = arith.constant 0 : i32
    return %c0_i32, %c0_i32_0 : i32, i32
  }
  func.func @transform_4(%arg0: i32, %arg1: memref<4xi32, #tpu.memory_space<smem>>) -> (i32, i32, i32) {
    %c0_i32 = arith.constant 0 : i32
    %c0_i32_0 = arith.constant 0 : i32
    %c0_i32_1 = arith.constant 0 : i32
    %c0_i32_2 = arith.constant 0 : i32
    return %c0_i32, %c0_i32_0, %c0_i32_1 : i32, i32, i32
  }
  func.func @transform_5(%arg0: i32, %arg1: memref<4xi32, #tpu.memory_space<smem>>) -> (i32, i32) {
    %c0_i32 = arith.constant 0 : i32
    %c0_i32_0 = arith.constant 0 : i32
    %c0_i32_1 = arith.constant 0 : i32
    return %c0_i32, %c0_i32_0 : i32, i32
  }
  func.func @transform_6(%arg0: i32, %arg1: memref<4xi32, #tpu.memory_space<smem>>) -> (i32, i32, i32) {
    %c0_i32 = arith.constant 0 : i32
    %c0_i32_0 = arith.constant 0 : i32
    %c0_i32_1 = arith.constant 0 : i32
    %c0_i32_2 = arith.constant 0 : i32
    return %c0_i32, %c0_i32_0, %c0_i32_1 : i32, i32, i32
  }
  func.func @transform_7(%arg0: i32, %arg1: memref<4xi32, #tpu.memory_space<smem>>) -> (i32, i32) {
    %c0_i32 = arith.constant 0 : i32
    %c0_i32_0 = arith.constant 0 : i32
    %c0_i32_1 = arith.constant 0 : i32
    return %c0_i32, %c0_i32_0 : i32, i32
  }
  func.func @transform_8(%arg0: i32, %arg1: memref<4xi32, #tpu.memory_space<smem>>) -> (i32, i32) {
    %c0_i32 = arith.constant 0 : i32
    %c0_i32_0 = arith.constant 0 : i32
    return %arg0, %c0_i32 : i32, i32
  }
  func.func @transform_9(%arg0: i32, %arg1: memref<4xi32, #tpu.memory_space<smem>>) -> (i32, i32, i32, i32) {
    %c0_i32 = arith.constant 0 : i32
    %c0_i32_0 = arith.constant 0 : i32
    %c0_i32_1 = arith.constant 0 : i32
    %c0_i32_2 = arith.constant 0 : i32
    return %c0_i32, %arg0, %c0_i32_0, %c0_i32_1 : i32, i32, i32, i32
  }
}

</mosaic_0001>

<llo_original>
// kernel: tpu_custom_call.1
$region0: #{tpu_custom_call.1}
  #allocation0 [shape = 'u32[]', space=smem, size = 0x4, offset = 0x4, fixed_abs, tag = 'smem constant byte address 0x4 - core index']
  #allocation1 [shape = 'u32[144,128]{1,0:T(1,128)}', space=vmem, size = 0x12000, scoped, tag = 'internal scratch']
  #allocation2 [shape = 'f32[16,32]{1,0:T(8,128)}', space=vmem, size = 0x2000, scoped, tag = 'scratch operand']
  #allocation3 [shape = 'f32[32,64]{1,0:T(8,128)}', space=vmem, size = 0x4000, scoped, tag = 'scratch operand']
  #allocation4 [shape = 's32[1]{0}', space=sflag, size = 0x4, scoped, tag = 'scoped memory for tpu_custom_call.1']
  #allocation5 [shape = 'u8[512]{0}', space=smem, size = 0x200, scoped, tag = 'prefetched SMEM operand 0']
  #allocation15 [shape = 's32[]', space=sflag, size = 0x4, offset = 0, fixed_abs, tag = 'sflag constant byte address 0x0 - dummy sync flag']
  %s0 = inlined_call_operand.vmem [shape: s32[4], index: 0, kind: input, shape index: {}]
  %s1 = inlined_call_operand.hbm [shape: f32[32,32], index: 1, kind: input, shape index: {}]
  %s2 = inlined_call_operand.hbm [shape: f32[32,96], index: 2, kind: input, shape index: {}]
  %s3 = inlined_call_operand.vmem [shape: f32[1,96], index: 3, kind: input, shape index: {}]
  %s4 = inlined_call_operand.hbm [shape: f32[32,32], index: 4, kind: input, shape index: {}]
  %s5 = inlined_call_operand.vmem [shape: f32[3,32,64], index: 5, kind: input, shape index: {}]
  %s6 = inlined_call_operand.vmem [shape: f32[1,64], index: 6, kind: input, shape index: {}]
  %s7 = inlined_call_operand.vmem [shape: f32[1,64,32], index: 7, kind: input, shape index: {}]
  %s8 = inlined_call_operand.vmem [shape: f32[6,32], index: 8, kind: input, shape index: {}]
  %s9 = inlined_call_operand.hbm [shape: f32[32,32], index: 9, kind: output, shape index: {0}]
  %s10 = inlined_call_operand.hbm [shape: bf16[2,4,8,8], index: 10, kind: output, shape index: {1}]
  %11 = xla_tuple %s9, %s10
  %s12 = sld [smem:[#allocation0]]
  $region85: #{tpu_custom_call.1} parent=0
    _
  %s14 = ssub.s32 1, %s12
  %s15 = scalar_select 0, %s14, %s12
  %s16 = sshll.u32 %s0, 4
  %s17 = int_to_ptr.vmem [resolvable:$true] %s16
  %19 = dma.vmem_to_smem %s17, 16, [#allocation5], [#allocation4]
  %20 = dma.done [#allocation4], 16
  %21 = sfence
  $region1: #{tpu_custom_call.1} parent=0
    #allocation6 [shape = 'u8[16384]{0}', space=vmem, size = 0x4000, scoped, tag = 'input window, operand 1']
    #allocation7 [shape = 's32[2]{0}', space=sflag, size = 0x8, scoped, tag = 'scoped memory for tpu_custom_call.1']
    #allocation8 [shape = 's32[2]{0}', space=sflag, size = 0x8, scoped, tag = 'scoped memory for tpu_custom_call.1']
    #allocation9 [shape = 'u8[16384]{0}', space=vmem, size = 0x4000, scoped, tag = 'input window, operand 2, single buffered']
    #allocation10 [shape = 's32[1]{0}', space=sflag, size = 0x4, scoped, tag = 'scoped memory for tpu_custom_call.1']
    #allocation11 [shape = 'u8[16384]{0}', space=vmem, size = 0x4000, scoped, tag = 'input window, operand 4, single buffered']
    #allocation12 [shape = 'u8[16384]{0}', space=vmem, size = 0x4000, scoped, tag = 'output window, operand 0']
    #allocation13 [shape = 'u8[16384]{0}', space=vmem, size = 0x4000, scoped, tag = 'output window, operand 1']
    #allocation14 [shape = 's32[2]{0}', space=sflag, size = 0x8, scoped, tag = 'scoped memory for tpu_custom_call.1']
    %22 = vsyncpa [#allocation7], 0
    %s23 = scalar_lea.sflag [#allocation7], 1
    %24 = vsyncpa %s23, 0
    %25 = vsyncpa [#allocation10], 0
    %26 = vsyncpa [#allocation8], 0
    %s27 = scalar_lea.sflag [#allocation8], 1
    %28 = vsyncpa %s27, 0
    %29 = vsyncpa [#allocation14], 0
    %s30 = scalar_lea.sflag [#allocation14], 1
    %31 = vsyncpa %s30, 0
    loop: start=0, step=1, limit=4
    $region2: #{tpu_custom_call.1} parent=1 // loop_pre_header
      _
    $region3: #{tpu_custom_call.1} parent=1 // loop_header
      %s33 = sphi 0, %s37
      %p34 = scmp.ge.s32.totalorder %s33, 4
      %s43 = sphi 0, %s45
      %s46 = sphi 0, %s43
      %s47 = sphi 0, %s46
      %s63 = sphi 0, %s47
      %s67 = sphi 0, %s67
      %s69 = sphi 0, %s67
      %s70 = sphi 0, %s69
      %s84 = sphi 0, %s70
      %s88 = sphi 0, %s88
      %s90 = sphi 0, %s88
      %s91 = sphi 0, %s90
      %s105 = sphi 0, %s91
      %s109 = sphi 0, %s109
      %s111 = sphi 0, %s109
      %s112 = sphi 0, %s111
      %s126 = sphi 0, %s112
      %s130 = sphi 0, %s130
      %s132 = sphi 0, %s130
      %s133 = sphi 0, %s132
      %s147 = sphi 0, %s133
      %s151 = sphi 0, %s151
      %s153 = sphi 0, %s151
      %s154 = sphi 0, %s153
      %s168 = sphi 0, %s154
      %s172 = sphi 0, %s172
      %s174 = sphi 0, %s172
      %s175 = sphi 0, %s174
      %s189 = sphi 0, %s175
      %s193 = sphi 0, %s193
      %s195 = sphi 0, %s193
      %s196 = sphi 0, %s195
      %s210 = sphi 0, %s196
      %s216 = sphi 0, %s218
      %s219 = sphi 0, %s216
      %s220 = sphi 0, %s219
      %s236 = sphi 0, %s220
      %s242 = sphi 0, %s244
      %s245 = sphi 0, %s242
      %s246 = sphi 0, %s245
      %s262 = sphi 0, %s246
    $region4: #{tpu_custom_call.1} parent=1 // loop_header_branch
      %36 = sbr.rel (%p34) target = $region8
    $region5: #{tpu_custom_call.1} parent=1 // loop_body
      %s38 = ssub.s32 %s33, 1
      %s39 = ssub.s32 %s33, 2
      %s40 = sadd.s32 %s33, 1
      %s41 = ssub.s32 %s33, %s40
      %p42 = scmp.eq.s32.totalorder %s41, 0
      %s44 = sadd.s32 %s43, 1
      %s45 = scalar_select %p42, %s43, %s44
      %p48 = pneg %p42
      %p49 = scmp.eq.s32.totalorder %s33, 1
      %p50 = por %p48, %p49
      %p51 = scmp.ne.s32.totalorder %s43, %s46
      %p52 = scmp.eq.s32.totalorder %s33, 0
      %p53 = por %p51, %p52
      %p54 = scmp.ne.s32.totalorder %s43, %s46
      %p55 = scmp.eq.s32.totalorder %s38, 1
      %p56 = por %p54, %p55
      %p57 = scmp.ne.s32.totalorder %s46, %s47
      %p58 = scmp.eq.s32.totalorder %s38, 0
      %p59 = por %p57, %p58
      %p60 = scmp.ne.s32.totalorder %s46, %s47
      %p61 = scmp.eq.s32.totalorder %s39, 1
      %p62 = por %p60, %p61
      %p64 = scmp.ne.s32.totalorder %s47, %s63
      %p65 = scmp.eq.s32.totalorder %s39, 0
      %p66 = por %p64, %p65
      %s68 = sadd.s32 %s67, 1
      %p71 = scmp.eq.s32.totalorder %s33, 1
      %p72 = scmp.ne.s32.totalorder %s67, %s69
      %p73 = scmp.eq.s32.totalorder %s33, 0
      %p74 = por %p72, %p73
      %p75 = scmp.ne.s32.totalorder %s67, %s69
      %p76 = scmp.eq.s32.totalorder %s38, 1
      %p77 = por %p75, %p76
      %p78 = scmp.ne.s32.totalorder %s69, %s70
      %p79 = scmp.eq.s32.totalorder %s38, 0
      %p80 = por %p78, %p79
      %p81 = scmp.ne.s32.totalorder %s69, %s70
      %p82 = scmp.eq.s32.totalorder %s39, 1
      %p83 = por %p81, %p82
      %p85 = scmp.ne.s32.totalorder %s70, %s84
      %p86 = scmp.eq.s32.totalorder %s39, 0
      %p87 = por %p85, %p86
      %s89 = sadd.s32 %s88, 1
      %p92 = scmp.eq.s32.totalorder %s33, 1
      %p93 = scmp.ne.s32.totalorder %s88, %s90
      %p94 = scmp.eq.s32.totalorder %s33, 0
      %p95 = por %p93, %p94
      %p96 = scmp.ne.s32.totalorder %s88, %s90
      %p97 = scmp.eq.s32.totalorder %s38, 1
      %p98 = por %p96, %p97
      %p99 = scmp.ne.s32.totalorder %s90, %s91
      %p100 = scmp.eq.s32.totalorder %s38, 0
      %p101 = por %p99, %p100
      %p102 = scmp.ne.s32.totalorder %s90, %s91
      %p103 = scmp.eq.s32.totalorder %s39, 1
      %p104 = por %p102, %p103
      %p106 = scmp.ne.s32.totalorder %s91, %s105
      %p107 = scmp.eq.s32.totalorder %s39, 0
      %p108 = por %p106, %p107
      %s110 = sadd.s32 %s109, 1
      %p113 = scmp.eq.s32.totalorder %s33, 1
      %p114 = scmp.ne.s32.totalorder %s109, %s111
      %p115 = scmp.eq.s32.totalorder %s33, 0
      %p116 = por %p114, %p115
      %p117 = scmp.ne.s32.totalorder %s109, %s111
      %p118 = scmp.eq.s32.totalorder %s38, 1
      %p119 = por %p117, %p118
      %p120 = scmp.ne.s32.totalorder %s111, %s112
      %p121 = scmp.eq.s32.totalorder %s38, 0
      %p122 = por %p120, %p121
      %p123 = scmp.ne.s32.totalorder %s111, %s112
      %p124 = scmp.eq.s32.totalorder %s39, 1
      %p125 = por %p123, %p124
      %p127 = scmp.ne.s32.totalorder %s112, %s126
      %p128 = scmp.eq.s32.totalorder %s39, 0
      %p129 = por %p127, %p128
      %s131 = sadd.s32 %s130, 1
      %p134 = scmp.eq.s32.totalorder %s33, 1
      %p135 = scmp.ne.s32.totalorder %s130, %s132
      %p136 = scmp.eq.s32.totalorder %s33, 0
      %p137 = por %p135, %p136
      %p138 = scmp.ne.s32.totalorder %s130, %s132
      %p139 = scmp.eq.s32.totalorder %s38, 1
      %p140 = por %p138, %p139
      %p141 = scmp.ne.s32.totalorder %s132, %s133
      %p142 = scmp.eq.s32.totalorder %s38, 0
      %p143 = por %p141, %p142
      %p144 = scmp.ne.s32.totalorder %s132, %s133
      %p145 = scmp.eq.s32.totalorder %s39, 1
      %p146 = por %p144, %p145
      %p148 = scmp.ne.s32.totalorder %s133, %s147
      %p149 = scmp.eq.s32.totalorder %s39, 0
      %p150 = por %p148, %p149
      %s152 = sadd.s32 %s151, 1
      %p155 = scmp.eq.s32.totalorder %s33, 1
      %p156 = scmp.ne.s32.totalorder %s151, %s153
      %p157 = scmp.eq.s32.totalorder %s33, 0
      %p158 = por %p156, %p157
      %p159 = scmp.ne.s32.totalorder %s151, %s153
      %p160 = scmp.eq.s32.totalorder %s38, 1
      %p161 = por %p159, %p160
      %p162 = scmp.ne.s32.totalorder %s153, %s154
      %p163 = scmp.eq.s32.totalorder %s38, 0
      %p164 = por %p162, %p163
      %p165 = scmp.ne.s32.totalorder %s153, %s154
      %p166 = scmp.eq.s32.totalorder %s39, 1
      %p167 = por %p165, %p166
      %p169 = scmp.ne.s32.totalorder %s154, %s168
      %p170 = scmp.eq.s32.totalorder %s39, 0
      %p171 = por %p169, %p170
      %s173 = sadd.s32 %s172, 1
      %p176 = scmp.eq.s32.totalorder %s33, 1
      %p177 = scmp.ne.s32.totalorder %s172, %s174
      %p178 = scmp.eq.s32.totalorder %s33, 0
      %p179 = por %p177, %p178
      %p180 = scmp.ne.s32.totalorder %s172, %s174
      %p181 = scmp.eq.s32.totalorder %s38, 1
      %p182 = por %p180, %p181
      %p183 = scmp.ne.s32.totalorder %s174, %s175
      %p184 = scmp.eq.s32.totalorder %s38, 0
      %p185 = por %p183, %p184
      %p186 = scmp.ne.s32.totalorder %s174, %s175
      %p187 = scmp.eq.s32.totalorder %s39, 1
      %p188 = por %p186, %p187
      %p190 = scmp.ne.s32.totalorder %s175, %s189
      %p191 = scmp.eq.s32.totalorder %s39, 0
      %p192 = por %p190, %p191
      %s194 = sadd.s32 %s193, 1
      %p197 = scmp.eq.s32.totalorder %s33, 1
      %p198 = scmp.ne.s32.totalorder %s193, %s195
      %p199 = scmp.eq.s32.totalorder %s33, 0
      %p200 = por %p198, %p199
      %p201 = scmp.ne.s32.totalorder %s193, %s195
      %p202 = scmp.eq.s32.totalorder %s38, 1
      %p203 = por %p201, %p202
      %p204 = scmp.ne.s32.totalorder %s195, %s196
      %p205 = scmp.eq.s32.totalorder %s38, 0
      %p206 = por %p204, %p205
      %p207 = scmp.ne.s32.totalorder %s195, %s196
      %p208 = scmp.eq.s32.totalorder %s39, 1
      %p209 = por %p207, %p208
      %p211 = scmp.ne.s32.totalorder %s196, %s210
      %p212 = scmp.eq.s32.totalorder %s39, 0
      %p213 = por %p211, %p212
      %s214 = ssub.s32 %s33, %s40
      %p215 = scmp.eq.s32.totalorder %s214, 0
      %s217 = sadd.s32 %s216, 1
      %s218 = scalar_select %p215, %s216, %s217
      %p221 = pneg %p215
      %p222 = scmp.eq.s32.totalorder %s33, 1
      %p223 = por %p221, %p222
      %p224 = scmp.ne.s32.totalorder %s216, %s219
      %p225 = scmp.eq.s32.totalorder %s33, 0
      %p226 = por %p224, %p225
      %p227 = scmp.ne.s32.totalorder %s216, %s219
      %p228 = scmp.eq.s32.totalorder %s38, 1
      %p229 = por %p227, %p228
      %p230 = scmp.ne.s32.totalorder %s219, %s220
      %p231 = scmp.eq.s32.totalorder %s38, 0
      %p232 = por %p230, %p231
      %p233 = scmp.ne.s32.totalorder %s219, %s220
      %p234 = scmp.eq.s32.totalorder %s39, 1
      %p235 = por %p233, %p234
      %p237 = scmp.ne.s32.totalorder %s220, %s236
      %p238 = scmp.eq.s32.totalorder %s39, 0
      %p239 = por %p237, %p238
      %s240 = ssub.s32 %s33, %s40
      %p241 = scmp.eq.s32.totalorder %s240, 0
      %s243 = sadd.s32 %s242, 1
      %s244 = scalar_select %p241, %s242, %s243
      %p247 = pneg %p241
      %p248 = scmp.eq.s32.totalorder %s33, 1
      %p249 = por %p247, %p248
      %p250 = scmp.ne.s32.totalorder %s242, %s245
      %p251 = scmp.eq.s32.totalorder %s33, 0
      %p252 = por %p250, %p251
      %p253 = scmp.ne.s32.totalorder %s242, %s245
      %p254 = scmp.eq.s32.totalorder %s38, 1
      %p255 = por %p253, %p254
      %p256 = scmp.ne.s32.totalorder %s245, %s246
      %p257 = scmp.eq.s32.totalorder %s38, 0
      %p258 = por %p256, %p257
      %p259 = scmp.ne.s32.totalorder %s245, %s246
      %p260 = scmp.eq.s32.totalorder %s39, 1
      %p261 = por %p259, %p260
      %p263 = scmp.ne.s32.totalorder %s246, %s262
      %p264 = scmp.eq.s32.totalorder %s39, 0
      %p265 = por %p263, %p264
      %p266 = scmp.le.s32.totalorder 1, %s33
      %p267 = scmp.lt.s32.totalorder %s33, 3
      %p268 = pnand %p266, %p267
      %p269 = pneg %p268
      // Predicated region
      $region9: #{tpu_custom_call.1} parent=5 // pred_check
        _
      $region10: #{tpu_custom_call.1} parent=5 // pred_check_branch
        %271 = sbr.rel (%p268) target = $region12
      $region11: #{tpu_custom_call.1} parent=5 // pred_region
        %s272 = ssub.s32 %s33, 1
        // Predicated region
        $region13: #{tpu_custom_call.1} parent=11 // pred_check
          %p273 = pneg %p80
        $region14: #{tpu_custom_call.1} parent=11 // pred_check_branch
          %275 = sbr.rel (%p273) target = $region16
        $region15: #{tpu_custom_call.1} parent=11 // pred_region
          %s277 = ssub.s32 512, 512
          %278 = vsyncadd [#allocation10], %s277
          %s279 = sshll.u32 [#allocation9], 4
          %s280 = int_to_ptr.vmem [resolvable:$true] %s279
          %285 = dma.hbm_to_vmem [thread:$0]  %s2, 512, %s280, [#allocation10], 128, 128, 8
        $region16: #{tpu_custom_call.1} parent=11 // pred_fallthru
          _
        // Predicated region
        $region17: #{tpu_custom_call.1} parent=11 // pred_check
          %p286 = pneg %p101
        $region18: #{tpu_custom_call.1} parent=11 // pred_check_branch
          %288 = sbr.rel (%p286) target = $region20
        $region19: #{tpu_custom_call.1} parent=11 // pred_region
          _
        $region20: #{tpu_custom_call.1} parent=11 // pred_fallthru
          _
        // Predicated region
        $region21: #{tpu_custom_call.1} parent=11 // pred_check
          %p289 = pneg %p122
        $region22: #{tpu_custom_call.1} parent=11 // pred_check_branch
          %291 = sbr.rel (%p289) target = $region24
        $region23: #{tpu_custom_call.1} parent=11 // pred_region
          %s293 = ssub.s32 512, 512
          %294 = vsyncadd [#allocation10], %s293
          %s295 = sshll.u32 [#allocation11], 4
          %s296 = int_to_ptr.vmem [resolvable:$true] %s295
          %301 = dma.hbm_to_vmem [thread:$0]  %s4, 512, %s296, [#allocation10], 128, 128, 8
        $region24: #{tpu_custom_call.1} parent=11 // pred_fallthru
          _
        // Predicated region
        $region25: #{tpu_custom_call.1} parent=11 // pred_check
          %p302 = pneg %p143
        $region26: #{tpu_custom_call.1} parent=11 // pred_check_branch
          %304 = sbr.rel (%p302) target = $region28
        $region27: #{tpu_custom_call.1} parent=11 // pred_region
          _
        $region28: #{tpu_custom_call.1} parent=11 // pred_fallthru
          _
        // Predicated region
        $region29: #{tpu_custom_call.1} parent=11 // pred_check
          %p305 = pneg %p164
        $region30: #{tpu_custom_call.1} parent=11 // pred_check_branch
          %307 = sbr.rel (%p305) target = $region32
        $region31: #{tpu_custom_call.1} parent=11 // pred_region
          _
        $region32: #{tpu_custom_call.1} parent=11 // pred_fallthru
          _
        // Predicated region
        $region33: #{tpu_custom_call.1} parent=11 // pred_check
          %p308 = pneg %p185
        $region34: #{tpu_custom_call.1} parent=11 // pred_check_branch
          %310 = sbr.rel (%p308) target = $region36
        $region35: #{tpu_custom_call.1} parent=11 // pred_region
          _
        $region36: #{tpu_custom_call.1} parent=11 // pred_fallthru
          _
        // Predicated region
        $region37: #{tpu_custom_call.1} parent=11 // pred_check
          %p311 = pneg %p206
        $region38: #{tpu_custom_call.1} parent=11 // pred_check_branch
          %313 = sbr.rel (%p311) target = $region40
        $region39: #{tpu_custom_call.1} parent=11 // pred_region
          _
        $region40: #{tpu_custom_call.1} parent=11 // pred_fallthru
          _
      $region12: #{tpu_custom_call.1} parent=5 // pred_fallthru
        _
      %p314 = scmp.lt.s32.totalorder %s33, 2
      // Predicated region
      $region41: #{tpu_custom_call.1} parent=5 // pred_check
        %p315 = pneg %p314
      $region42: #{tpu_custom_call.1} parent=5 // pred_check_branch
        %317 = sbr.rel (%p315) target = $region44
      $region43: #{tpu_custom_call.1} parent=5 // pred_region
        // Predicated region
        $region45: #{tpu_custom_call.1} parent=43 // pred_check
          %p318 = pneg %p53
        $region46: #{tpu_custom_call.1} parent=43 // pred_check_branch
          %320 = sbr.rel (%p318) target = $region48
        $region47: #{tpu_custom_call.1} parent=43 // pred_region
          %s321 = sand.u32 %s43, 1
          %s322 = scalar_lea.sflag [#allocation7], %s321
          %s323 = sand.u32 %s43, 1
          %s324 = smul.addr %s323, 16
          %s325 = scalar_lea.vmem [#allocation6], %s324
          %s326 = smul.u32 2, %s33
          %s328 = ssub.s32 256, 256
          %329 = vsyncadd %s322, %s328
          %s330 = smul.addr %s326, 128
          %s331 = scalar_lea.hbm %s1, %s330
          %s332 = sshll.u32 %s325, 4
          %s333 = int_to_ptr.vmem [resolvable:$true] %s332
          %338 = dma.hbm_to_vmem [thread:$0]  %s331, 256, %s333, %s322, 128, 128, 8
        $region48: #{tpu_custom_call.1} parent=43 // pred_fallthru
          _
      $region44: #{tpu_custom_call.1} parent=5 // pred_fallthru
        _
      %p339 = scmp.le.s32.totalorder 1, %s33
      %p340 = scmp.lt.s32.totalorder %s33, 3
      %p341 = pnand %p339, %p340
      %p342 = pneg %p341
      // Predicated region
      $region49: #{tpu_custom_call.1} parent=5 // pred_check
        _
      $region50: #{tpu_custom_call.1} parent=5 // pred_check_branch
        %344 = sbr.rel (%p341) target = $region52
      $region51: #{tpu_custom_call.1} parent=5 // pred_region
        %s345 = ssub.s32 %s33, 1
        %s346 = sand.u32 %s46, 1
        %s347 = scalar_lea.sflag [#allocation7], %s346
        %s348 = sand.u32 %s46, 1
        %s349 = smul.addr %s348, 16
        %s350 = scalar_lea.vmem [#allocation6], %s349
        // Predicated region
        $region53: #{tpu_custom_call.1} parent=51 // pred_check
          %p351 = pneg %p59
        $region54: #{tpu_custom_call.1} parent=51 // pred_check_branch
          %353 = sbr.rel (%p351) target = $region56
        $region55: #{tpu_custom_call.1} parent=51 // pred_region
          %354 = dma.done %s347, 256
        $region56: #{tpu_custom_call.1} parent=51 // pred_fallthru
          _
        // Predicated region
        $region57: #{tpu_custom_call.1} parent=51 // pred_check
          %p355 = pneg %p80
        $region58: #{tpu_custom_call.1} parent=51 // pred_check_branch
          %357 = sbr.rel (%p355) target = $region60
        $region59: #{tpu_custom_call.1} parent=51 // pred_region
          %358 = dma.done [#allocation10], 512
        $region60: #{tpu_custom_call.1} parent=51 // pred_fallthru
          _
        // Predicated region
        $region61: #{tpu_custom_call.1} parent=51 // pred_check
          %p359 = pneg %p122
        $region62: #{tpu_custom_call.1} parent=51 // pred_check_branch
          %361 = sbr.rel (%p359) target = $region64
        $region63: #{tpu_custom_call.1} parent=51 // pred_region
          %362 = dma.done [#allocation10], 512
        $region64: #{tpu_custom_call.1} parent=51 // pred_fallthru
          _
        %s363 = sand.u32 %s46, 1
        %s364 = scalar_lea.sflag [#allocation7], %s363
        %s365 = sand.u32 %s46, 1
        %s366 = smul.addr %s365, 16
        %s367 = scalar_lea.vmem [#allocation6], %s366
        %p368 = pneg %p59
        %p369 = pneg %p56
        %p370 = pneg %p80
        %p371 = pneg %p77
        %p372 = pneg %p101
        %p373 = pneg %p98
        %p374 = pneg %p122
        %p375 = pneg %p119
        %p376 = pneg %p143
        %p377 = pneg %p140
        %p378 = pneg %p164
        %p379 = pneg %p161
        %p380 = pneg %p185
        %p381 = pneg %p182
        %p382 = pneg %p206
        %p383 = pneg %p203
        %p384 = pneg %p232
        %p385 = pneg %p229
        %s386 = sand.u32 %s219, 1
        %s387 = scalar_lea.sflag [#allocation8], %s386
        %s388 = sand.u32 %s219, 1
        %s389 = smul.addr %s388, 16
        %s390 = scalar_lea.vmem [#allocation12], %s389
        %p391 = pneg %p258
        %p392 = pneg %p255
        %s393 = sand.u32 %s245, 1
        %s394 = scalar_lea.sflag [#allocation14], %s393
        %s395 = sand.u32 %s245, 1
        %s396 = smul.addr %s395, 16
        %s397 = scalar_lea.vmem [#allocation13], %s396
        %s398 = smul.u32 2, %s38
        %s399 = smul.u32 2, %s38
        %s400 = smul.u32 2, %s38
        %v401 = vld [vmem:[%s350] sm:$0xff]
        %v402 = vld [vmem:[%s350 + $0x8] sm:$0xff]
        %v403 = vld [vmem:[%s8] sm:$0x3f]
        %v404 = vlaneseq
        %v405 = vshrl.u32 %v404, 7
        %v406 = vadd.s32 %v405, 8
        %vm407 = vcmp.ge.s32.totalorder %v405, 8
        %vm408 = vcmp.ge.s32.totalorder %v406, 8
        %v409 = vsel %vm407, 1, 0
        %v410 = vsel %vm408, 1, 0
        %v411 = vmul.u32 %v409, 8
        %v412 = vmul.u32 %v410, 8
        %v413 = vsub.s32 %v405, %v411
        %v414 = vsub.s32 %v406, %v412
        %s415 = smul.u32 %s38, 2
        %s416 = sld [smem:[#allocation5 + %s415]]
        %vm417 = vcmp.eq.s32.totalorder %v409, 0
        %vm418 = vcmp.eq.s32.totalorder %v410, 0
        %v419 = vstv %s416
        %v420 = vsel %vm417, %v419, 0
        %v421 = vsel %vm418, %v419, 0
        %s422 = sadd.s32 %s415, 1
        %s423 = sld [smem:[#allocation5 + %s422]]
        %vm424 = vcmp.eq.s32.totalorder %v409, 1
        %vm425 = vcmp.eq.s32.totalorder %v410, 1
        %v426 = vstv %s423
        %v427 = vsel %vm424, %v426, %v420
        %v428 = vsel %vm425, %v426, %v421
        %vm429 = vcmp.lt.s32.totalorder %v413, %v427
        %vm430 = vcmp.lt.s32.totalorder %v414, %v428
        %v431 = vsel %vm429, 1, 0
        %v432 = vsel %vm430, 1, 0
        %v433 = vcvt.s32.f32 %v431
        %v434 = vcvt.s32.f32 %v432
        %v435 = vld [vmem:[#allocation9] sm:$0xff]
        %v436 = vld [vmem:[#allocation9 + $0x8] sm:$0xff]
        %v437 = vld [vmem:[#allocation9 + $0x10] sm:$0xff]
        %v438 = vld [vmem:[#allocation9 + $0x18] sm:$0xff]
        %v439 = vld [vmem:[%s3] sm:$0x1]
        %v441 = vlaneseq
        %v442 = vshrl.u32 %v441, 7
        %v443 = vsub.s32 0, %v442
        %v444 = vrot.slane %v439, %v443
        %vm446 = vcmask 261120
        %v448 = vsel %vm446, %v401, 0
        %v451 = vsel %vm446, %v402, 0
        %453 = vmatprep.subr.mxu0 0.0
        %454 = vmatpush1.msra.mxu0 %v435
        %455 = vmatprep.subr.mxu0 0.0
        %456 = vmatpush1.msra.mxu0 %v436
        %457 = vmatprep.subr.mxu0 0.0
        %458 = vmatpush1.msra.mxu0 %v437
        %459 = vmatprep.subr.mxu0 0.0
        %460 = vmatpush1.msra.mxu0 %v438
        %461 = vmatprep.subr.mxu0 0.0
        %462 = vmatpush1.msra.mxu0 0.0
        %463 = vmatprep.subr.mxu0 0.0
        %464 = vmatpush1.msra.mxu0 0.0
        %465 = vmatprep.subr.mxu0 0.0
        %466 = vmatpush1.msra.mxu0 0.0
        %467 = vmatprep.subr.mxu0 0.0
        %468 = vmatpush1.msra.mxu0 0.0
        %469 = vmatprep.subr.mxu0 0.0
        %470 = vmatpush1.msra.mxu0 0.0
        %471 = vmatprep.subr.mxu0 0.0
        %472 = vmatpush1.msra.mxu0 0.0
        %473 = vmatprep.subr.mxu0 0.0
        %474 = vmatpush1.msra.mxu0 0.0
        %475 = vmatprep.subr.mxu0 0.0
        %476 = vmatpush1.msra.mxu0 0.0
        %477 = vmatprep.subr.mxu0 0.0
        %478 = vmatpush1.msra.mxu0 0.0
        %479 = vmatprep.subr.mxu0 0.0
        %480 = vmatpush1.msra.mxu0 0.0
        %481 = vmatprep.subr.mxu0 0.0
        %482 = vmatpush1.msra.mxu0 0.0
        %483 = vmatprep.subr.mxu0 0.0
        %484 = vmatpush1.msra.mxu0 0.0
        %485 = vmatprep.subr.mxu0 0.0
        %486 = vmatpush1.msra.mxu0 0.0
        %487 = vmatprep.subr.mxu0 0.0
        %488 = vmatpush1.msra.mxu0 0.0
        %489 = vmatprep.subr.mxu0 0.0
        %490 = vmatpush1.msra.mxu0 0.0
        %491 = vmatprep.subr.mxu0 0.0
        %492 = vmatpush1.msra.mxu0 0.0
        %493 = vmatprep.subr.mxu0 0.0
        %494 = vmatpush1.msra.mxu0 0.0
        %495 = vmatprep.subr.mxu0 0.0
        %496 = vmatpush1.msra.mxu0 0.0
        %497 = vmatprep.subr.mxu0 0.0
        %498 = vmatpush1.msra.mxu0 0.0
        %499 = vmatprep.subr.mxu0 0.0
        %500 = vmatpush1.msra.mxu0 0.0
        %501 = vmatprep.subr.mxu0 0.0
        %502 = vmatpush1.msra.mxu0 0.0
        %503 = vmatprep.subr.mxu0 0.0
        %504 = vmatpush1.msra.mxu0 0.0
        %505 = vmatprep.subr.mxu0 0.0
        %506 = vmatpush1.msra.mxu0 0.0
        %507 = vmatprep.subr.mxu0 0.0
        %508 = vmatpush1.msra.mxu0 0.0
        %509 = vmatprep.subr.mxu0 0.0
        %510 = vmatpush1.msra.mxu0 0.0
        %511 = vmatprep.subr.mxu0 0.0
        %512 = vmatpush1.msra.mxu0 0.0
        %513 = vmatprep.subr.mxu0 0.0
        %514 = vmatpush1.msra.mxu0 0.0
        %515 = vmatprep.subr.mxu0 0.0
        %516 = vmatpush1.msra.mxu0 0.0
        %517 = vmatprep.mubr.f32.mxu0 0.0
        %518 = vmatmul.mubr.f32.gmra.mrb[0].mxu0 %v448
        %v519 = vpop.f32.mrb[0].mxu0
        %v520 = vadd.f32 %v444, %v519
        %v521 = vpop.f32.mrb[0].mxu0
        %522 = vmatprep.mubr.f32.mxu0 0.0
        %523 = vmatmul.mubr.f32.gmra.mrb[0].mxu0 %v451
        %v524 = vpop.f32.mrb[0].mxu0
        %v525 = vadd.f32 %v444, %v524
        %v526 = vpop.f32.mrb[0].mxu0
        %527 = vdwg.mxu0
        %v528 = vld [vmem:[#allocation11] sm:$0xff]
        %v529 = vld [vmem:[#allocation11 + $0x8] sm:$0xff]
        %v530 = vld [vmem:[#allocation11 + $0x10] sm:$0xff]
        %v531 = vld [vmem:[#allocation11 + $0x18] sm:$0xff]
        %v532 = vlaneseq
        %v533 = vand.u32 %v532, 127
        %535 = vrot.lane.b32.xlu0 %v520, 96
        %v536 = vpop.permute.xlu0 %535
        %vm537 = vcmask 130048
        %v538 = vsel %vm537, %v520, 0
        %v540 = vsel %vm537, %v536, 0
        %542 = vmatprep.subr.mxu0 0.0
        %543 = vmatpush1.xpose.msra.mxu0 %v540
        %544 = vmatprep.subr.mxu0 0.0
        %545 = vmatpush1.xpose.msra.mxu0 0.0
        %546 = vmatprep.subr.mxu0 0.0
        %547 = vmatpush1.xpose.msra.mxu0 0.0
        %548 = vmatprep.subr.mxu0 0.0
        %549 = vmatpush1.xpose.msra.mxu0 0.0
        %550 = vmatprep.subr.mxu0 0.0
        %551 = vmatpush1.xpose.msra.mxu0 0.0
        %552 = vmatprep.subr.mxu0 0.0
        %553 = vmatpush1.xpose.msra.mxu0 0.0
        %554 = vmatprep.subr.mxu0 0.0
        %555 = vmatpush1.xpose.msra.mxu0 0.0
        %556 = vmatprep.subr.mxu0 0.0
        %557 = vmatpush1.xpose.msra.mxu0 0.0
        %558 = vmatprep.subr.mxu0 0.0
        %559 = vmatpush1.xpose.msra.mxu0 0.0
        %560 = vmatprep.subr.mxu0 0.0
        %561 = vmatpush1.xpose.msra.mxu0 0.0
        %562 = vmatprep.subr.mxu0 0.0
        %563 = vmatpush1.xpose.msra.mxu0 0.0
        %564 = vmatprep.subr.mxu0 0.0
        %565 = vmatpush1.xpose.msra.mxu0 0.0
        %566 = vmatprep.subr.mxu0 0.0
        %567 = vmatpush1.xpose.msra.mxu0 0.0
        %568 = vmatprep.subr.mxu0 0.0
        %569 = vmatpush1.xpose.msra.mxu0 0.0
        %570 = vmatprep.subr.mxu0 0.0
        %571 = vmatpush1.xpose.msra.mxu0 0.0
        %572 = vmatprep.subr.mxu0 0.0
        %573 = vmatpush1.xpose.msra.mxu0 0.0
        %574 = vmatprep.subr.mxu0 0.0
        %575 = vmatpush1.xpose.msra.mxu0 0.0
        %576 = vmatprep.subr.mxu0 0.0
        %577 = vmatpush1.xpose.msra.mxu0 0.0
        %578 = vmatprep.subr.mxu0 0.0
        %579 = vmatpush1.xpose.msra.mxu0 0.0
        %580 = vmatprep.subr.mxu0 0.0
        %581 = vmatpush1.xpose.msra.mxu0 0.0
        %582 = vmatprep.subr.mxu0 0.0
        %583 = vmatpush1.xpose.msra.mxu0 0.0
        %584 = vmatprep.subr.mxu0 0.0
        %585 = vmatpush1.xpose.msra.mxu0 0.0
        %586 = vmatprep.subr.mxu0 0.0
        %587 = vmatpush1.xpose.msra.mxu0 0.0
        %588 = vmatprep.subr.mxu0 0.0
        %589 = vmatpush1.xpose.msra.mxu0 0.0
        %590 = vmatprep.subr.mxu0 0.0
        %591 = vmatpush1.xpose.msra.mxu0 0.0
        %592 = vmatprep.subr.mxu0 0.0
        %593 = vmatpush1.xpose.msra.mxu0 0.0
        %594 = vmatprep.subr.mxu0 0.0
        %595 = vmatpush1.xpose.msra.mxu0 0.0
        %596 = vmatprep.subr.mxu0 0.0
        %597 = vmatpush1.xpose.msra.mxu0 0.0
        %598 = vmatprep.subr.mxu0 0.0
        %599 = vmatpush1.xpose.msra.mxu0 0.0
        %600 = vmatprep.subr.mxu0 0.0
        %601 = vmatpush1.xpose.msra.mxu0 0.0
        %602 = vmatprep.subr.mxu0 0.0
        %603 = vmatpush1.xpose.msra.mxu0 0.0
        %604 = vmatprep.subr.mxu0 0.0
        %605 = vmatpush1.xpose.msra.mxu0 0.0
        %606 = vmatprep.mubr.f32.mxu0 0.0
        %607 = vmatmul.mubr.f32.gmra.mrb[0].mxu0 %v538
        %v608 = vpop.f32.mrb[0].mxu0
        %v609 = vadd.f32 0.0, %v608
        %v610 = vpop.f32.mrb[0].mxu0
        %611 = vdwg.mxu0
        %v612 = vmul.f32 %v609, 0.25
        %vm613 = vcmp.lt.s32.totalorder %v533, %v419
        %v614 = vsel %vm613, %v612, -1e+30
        %vm615 = vcmask 64512
        %v616 = vsel %vm615, %v614, -inf
        %617 = vmax.xlane.f32.xlu0 %v616
        %v618 = vpop.xlane.xlu0 %617
        %v619 = vsub.f32 %v614, %v618
        %v620 = vmul.f32 %v619, 1.442695
        %v621 = vpow.pop %v620
        %v622 = vsel %vm615, %v621, 0.0
        %623 = vadd.xlane.f32.xlu0 %v622
        %v624 = vpop.xlane.xlu0 %623
        %v625 = vrcp.pop %v624
        %v626 = vmul.f32 %v621, %v625
        %v627 = vpack.c.bf16 %v626, %v626
        %vm628 = vcmask 60416
        %629 = vst.msk [vmem:[%s397] sm:$0xf] %vm628, %v627
        %630 = vrot.lane.b32.xlu0 %v520, 64
        %v631 = vpop.permute.xlu0 %630
        %v634 = vsel %vm615, %v626, 0
        %636 = vmatprep.subr.mxu0 0.0
        %637 = vmatpush1.msra.mxu0 %v631
        %638 = vmatprep.subr.mxu0 0.0
        %639 = vmatpush1.msra.mxu0 0.0
        %640 = vmatprep.subr.mxu0 0.0
        %641 = vmatpush1.msra.mxu0 0.0
        %642 = vmatprep.subr.mxu0 0.0
        %643 = vmatpush1.msra.mxu0 0.0
        %644 = vmatprep.subr.mxu0 0.0
        %645 = vmatpush1.msra.mxu0 0.0
        %646 = vmatprep.subr.mxu0 0.0
        %647 = vmatpush1.msra.mxu0 0.0
        %648 = vmatprep.subr.mxu0 0.0
        %649 = vmatpush1.msra.mxu0 0.0
        %650 = vmatprep.subr.mxu0 0.0
        %651 = vmatpush1.msra.mxu0 0.0
        %652 = vmatprep.subr.mxu0 0.0
        %653 = vmatpush1.msra.mxu0 0.0
        %654 = vmatprep.subr.mxu0 0.0
        %655 = vmatpush1.msra.mxu0 0.0
        %656 = vmatprep.subr.mxu0 0.0
        %657 = vmatpush1.msra.mxu0 0.0
        %658 = vmatprep.subr.mxu0 0.0
        %659 = vmatpush1.msra.mxu0 0.0
        %660 = vmatprep.subr.mxu0 0.0
        %661 = vmatpush1.msra.mxu0 0.0
        %662 = vmatprep.subr.mxu0 0.0
        %663 = vmatpush1.msra.mxu0 0.0
        %664 = vmatprep.subr.mxu0 0.0
        %665 = vmatpush1.msra.mxu0 0.0
        %666 = vmatprep.subr.mxu0 0.0
        %667 = vmatpush1.msra.mxu0 0.0
        %668 = vmatprep.subr.mxu0 0.0
        %669 = vmatpush1.msra.mxu0 0.0
        %670 = vmatprep.subr.mxu0 0.0
        %671 = vmatpush1.msra.mxu0 0.0
        %672 = vmatprep.subr.mxu0 0.0
        %673 = vmatpush1.msra.mxu0 0.0
        %674 = vmatprep.subr.mxu0 0.0
        %675 = vmatpush1.msra.mxu0 0.0
        %676 = vmatprep.subr.mxu0 0.0
        %677 = vmatpush1.msra.mxu0 0.0
        %678 = vmatprep.subr.mxu0 0.0
        %679 = vmatpush1.msra.mxu0 0.0
        %680 = vmatprep.subr.mxu0 0.0
        %681 = vmatpush1.msra.mxu0 0.0
        %682 = vmatprep.subr.mxu0 0.0
        %683 = vmatpush1.msra.mxu0 0.0
        %684 = vmatprep.subr.mxu0 0.0
        %685 = vmatpush1.msra.mxu0 0.0
        %686 = vmatprep.subr.mxu0 0.0
        %687 = vmatpush1.msra.mxu0 0.0
        %688 = vmatprep.subr.mxu0 0.0
        %689 = vmatpush1.msra.mxu0 0.0
        %690 = vmatprep.subr.mxu0 0.0
        %691 = vmatpush1.msra.mxu0 0.0
        %692 = vmatprep.subr.mxu0 0.0
        %693 = vmatpush1.msra.mxu0 0.0
        %694 = vmatprep.subr.mxu0 0.0
        %695 = vmatpush1.msra.mxu0 0.0
        %696 = vmatprep.subr.mxu0 0.0
        %697 = vmatpush1.msra.mxu0 0.0
        %698 = vmatprep.subr.mxu0 0.0
        %699 = vmatpush1.msra.mxu0 0.0
        %700 = vmatprep.mubr.f32.mxu0 0.0
        %701 = vmatmul.mubr.f32.gmra.mrb[0].mxu0 %v634
        %v702 = vpop.f32.mrb[0].mxu0
        %v703 = vadd.f32 0.0, %v702
        %v704 = vpop.f32.mrb[0].mxu0
        %705 = vdwg.mxu0
        %706 = vrot.lane.b32.xlu0 %v520, 112
        %v707 = vpop.permute.xlu0 %706
        %708 = vrot.lane.b32.xlu0 %v520, 80
        %v709 = vpop.permute.xlu0 %708
        %v710 = vsel %vm537, %v707, 0
        %v712 = vsel %vm537, %v709, 0
        %714 = vmatprep.subr.mxu0 0.0
        %715 = vmatpush1.xpose.msra.mxu0 %v712
        %716 = vmatprep.subr.mxu0 0.0
        %717 = vmatpush1.xpose.msra.mxu0 0.0
        %718 = vmatprep.subr.mxu0 0.0
        %719 = vmatpush1.xpose.msra.mxu0 0.0
        %720 = vmatprep.subr.mxu0 0.0
        %721 = vmatpush1.xpose.msra.mxu0 0.0
        %722 = vmatprep.subr.mxu0 0.0
        %723 = vmatpush1.xpose.msra.mxu0 0.0
        %724 = vmatprep.subr.mxu0 0.0
        %725 = vmatpush1.xpose.msra.mxu0 0.0
        %726 = vmatprep.subr.mxu0 0.0
        %727 = vmatpush1.xpose.msra.mxu0 0.0
        %728 = vmatprep.subr.mxu0 0.0
        %729 = vmatpush1.xpose.msra.mxu0 0.0
        %730 = vmatprep.subr.mxu0 0.0
        %731 = vmatpush1.xpose.msra.mxu0 0.0
        %732 = vmatprep.subr.mxu0 0.0
        %733 = vmatpush1.xpose.msra.mxu0 0.0
        %734 = vmatprep.subr.mxu0 0.0
        %735 = vmatpush1.xpose.msra.mxu0 0.0
        %736 = vmatprep.subr.mxu0 0.0
        %737 = vmatpush1.xpose.msra.mxu0 0.0
        %738 = vmatprep.subr.mxu0 0.0
        %739 = vmatpush1.xpose.msra.mxu0 0.0
        %740 = vmatprep.subr.mxu0 0.0
        %741 = vmatpush1.xpose.msra.mxu0 0.0
        %742 = vmatprep.subr.mxu0 0.0
        %743 = vmatpush1.xpose.msra.mxu0 0.0
        %744 = vmatprep.subr.mxu0 0.0
        %745 = vmatpush1.xpose.msra.mxu0 0.0
        %746 = vmatprep.subr.mxu0 0.0
        %747 = vmatpush1.xpose.msra.mxu0 0.0
        %748 = vmatprep.subr.mxu0 0.0
        %749 = vmatpush1.xpose.msra.mxu0 0.0
        %750 = vmatprep.subr.mxu0 0.0
        %751 = vmatpush1.xpose.msra.mxu0 0.0
        %752 = vmatprep.subr.mxu0 0.0
        %753 = vmatpush1.xpose.msra.mxu0 0.0
        %754 = vmatprep.subr.mxu0 0.0
        %755 = vmatpush1.xpose.msra.mxu0 0.0
        %756 = vmatprep.subr.mxu0 0.0
        %757 = vmatpush1.xpose.msra.mxu0 0.0
        %758 = vmatprep.subr.mxu0 0.0
        %759 = vmatpush1.xpose.msra.mxu0 0.0
        %760 = vmatprep.subr.mxu0 0.0
        %761 = vmatpush1.xpose.msra.mxu0 0.0
        %762 = vmatprep.subr.mxu0 0.0
        %763 = vmatpush1.xpose.msra.mxu0 0.0
        %764 = vmatprep.subr.mxu0 0.0
        %765 = vmatpush1.xpose.msra.mxu0 0.0
        %766 = vmatprep.subr.mxu0 0.0
        %767 = vmatpush1.xpose.msra.mxu0 0.0
        %768 = vmatprep.subr.mxu0 0.0
        %769 = vmatpush1.xpose.msra.mxu0 0.0
        %770 = vmatprep.subr.mxu0 0.0
        %771 = vmatpush1.xpose.msra.mxu0 0.0
        %772 = vmatprep.subr.mxu0 0.0
        %773 = vmatpush1.xpose.msra.mxu0 0.0
        %774 = vmatprep.subr.mxu0 0.0
        %775 = vmatpush1.xpose.msra.mxu0 0.0
        %776 = vmatprep.subr.mxu0 0.0
        %777 = vmatpush1.xpose.msra.mxu0 0.0
        %778 = vmatprep.mubr.f32.mxu0 0.0
        %779 = vmatmul.mubr.f32.gmra.mrb[0].mxu0 %v710
        %v780 = vpop.f32.mrb[0].mxu0
        %v781 = vadd.f32 0.0, %v780
        %v782 = vpop.f32.mrb[0].mxu0
        %783 = vdwg.mxu0
        %v784 = vmul.f32 %v781, 0.25
        %v785 = vsel %vm613, %v784, -1e+30
        %v786 = vsel %vm615, %v785, -inf
        %787 = vmax.xlane.f32.xlu0 %v786
        %v788 = vpop.xlane.xlu0 %787
        %v789 = vsub.f32 %v785, %v788
        %v790 = vmul.f32 %v789, 1.442695
        %v791 = vpow.pop %v790
        %v792 = vsel %vm615, %v791, 0.0
        %793 = vadd.xlane.f32.xlu0 %v792
        %v794 = vpop.xlane.xlu0 %793
        %v795 = vrcp.pop %v794
        %v796 = vmul.f32 %v791, %v795
        %v797 = vpack.c.bf16 %v796, %v796
        %s798 = scalar_lea.vmem %s397, 8 [#allocation13]
        %799 = vst.msk [vmem:[%s798] sm:$0xf] %vm628, %v797
        %800 = vrot.lane.b32.xlu0 %v520, 48
        %v801 = vpop.permute.xlu0 %800
        %v804 = vsel %vm615, %v796, 0
        %806 = vmatprep.subr.mxu0 0.0
        %807 = vmatpush1.msra.mxu0 %v801
        %808 = vmatprep.subr.mxu0 0.0
        %809 = vmatpush1.msra.mxu0 0.0
        %810 = vmatprep.subr.mxu0 0.0
        %811 = vmatpush1.msra.mxu0 0.0
        %812 = vmatprep.subr.mxu0 0.0
        %813 = vmatpush1.msra.mxu0 0.0
        %814 = vmatprep.subr.mxu0 0.0
        %815 = vmatpush1.msra.mxu0 0.0
        %816 = vmatprep.subr.mxu0 0.0
        %817 = vmatpush1.msra.mxu0 0.0
        %818 = vmatprep.subr.mxu0 0.0
        %819 = vmatpush1.msra.mxu0 0.0
        %820 = vmatprep.subr.mxu0 0.0
        %821 = vmatpush1.msra.mxu0 0.0
        %822 = vmatprep.subr.mxu0 0.0
        %823 = vmatpush1.msra.mxu0 0.0
        %824 = vmatprep.subr.mxu0 0.0
        %825 = vmatpush1.msra.mxu0 0.0
        %826 = vmatprep.subr.mxu0 0.0
        %827 = vmatpush1.msra.mxu0 0.0
        %828 = vmatprep.subr.mxu0 0.0
        %829 = vmatpush1.msra.mxu0 0.0
        %830 = vmatprep.subr.mxu0 0.0
        %831 = vmatpush1.msra.mxu0 0.0
        %832 = vmatprep.subr.mxu0 0.0
        %833 = vmatpush1.msra.mxu0 0.0
        %834 = vmatprep.subr.mxu0 0.0
        %835 = vmatpush1.msra.mxu0 0.0
        %836 = vmatprep.subr.mxu0 0.0
        %837 = vmatpush1.msra.mxu0 0.0
        %838 = vmatprep.subr.mxu0 0.0
        %839 = vmatpush1.msra.mxu0 0.0
        %840 = vmatprep.subr.mxu0 0.0
        %841 = vmatpush1.msra.mxu0 0.0
        %842 = vmatprep.subr.mxu0 0.0
        %843 = vmatpush1.msra.mxu0 0.0
        %844 = vmatprep.subr.mxu0 0.0
        %845 = vmatpush1.msra.mxu0 0.0
        %846 = vmatprep.subr.mxu0 0.0
        %847 = vmatpush1.msra.mxu0 0.0
        %848 = vmatprep.subr.mxu0 0.0
        %849 = vmatpush1.msra.mxu0 0.0
        %850 = vmatprep.subr.mxu0 0.0
        %851 = vmatpush1.msra.mxu0 0.0
        %852 = vmatprep.subr.mxu0 0.0
        %853 = vmatpush1.msra.mxu0 0.0
        %854 = vmatprep.subr.mxu0 0.0
        %855 = vmatpush1.msra.mxu0 0.0
        %856 = vmatprep.subr.mxu0 0.0
        %857 = vmatpush1.msra.mxu0 0.0
        %858 = vmatprep.subr.mxu0 0.0
        %859 = vmatpush1.msra.mxu0 0.0
        %860 = vmatprep.subr.mxu0 0.0
        %861 = vmatpush1.msra.mxu0 0.0
        %862 = vmatprep.subr.mxu0 0.0
        %863 = vmatpush1.msra.mxu0 0.0
        %864 = vmatprep.subr.mxu0 0.0
        %865 = vmatpush1.msra.mxu0 0.0
        %866 = vmatprep.subr.mxu0 0.0
        %867 = vmatpush1.msra.mxu0 0.0
        %868 = vmatprep.subr.mxu0 0.0
        %869 = vmatpush1.msra.mxu0 0.0
        %870 = vmatprep.mubr.f32.mxu0 0.0
        %871 = vmatmul.mubr.f32.gmra.mrb[0].mxu0 %v804
        %v872 = vpop.f32.mrb[0].mxu0
        %v873 = vadd.f32 0.0, %v872
        %v874 = vpop.f32.mrb[0].mxu0
        %875 = vdwg.mxu0
        %v877 = vsel %vm537, %v873, 0
        %879 = vmatprep.subr.mxu0 0.0
        %880 = vmatpush1.msra.mxu0 %v530
        %881 = vmatprep.subr.mxu0 0.0
        %882 = vmatpush1.msra.mxu0 %v531
        %883 = vmatprep.subr.mxu0 0.0
        %884 = vmatpush1.msra.mxu0 0.0
        %885 = vmatprep.subr.mxu0 0.0
        %886 = vmatpush1.msra.mxu0 0.0
        %887 = vmatprep.subr.mxu0 0.0
        %888 = vmatpush1.msra.mxu0 0.0
        %889 = vmatprep.subr.mxu0 0.0
        %890 = vmatpush1.msra.mxu0 0.0
        %891 = vmatprep.subr.mxu0 0.0
        %892 = vmatpush1.msra.mxu0 0.0
        %893 = vmatprep.subr.mxu0 0.0
        %894 = vmatpush1.msra.mxu0 0.0
        %895 = vmatprep.subr.mxu0 0.0
        %896 = vmatpush1.msra.mxu0 0.0
        %897 = vmatprep.subr.mxu0 0.0
        %898 = vmatpush1.msra.mxu0 0.0
        %899 = vmatprep.subr.mxu0 0.0
        %900 = vmatpush1.msra.mxu0 0.0
        %901 = vmatprep.subr.mxu0 0.0
        %902 = vmatpush1.msra.mxu0 0.0
        %903 = vmatprep.subr.mxu0 0.0
        %904 = vmatpush1.msra.mxu0 0.0
        %905 = vmatprep.subr.mxu0 0.0
        %906 = vmatpush1.msra.mxu0 0.0
        %907 = vmatprep.subr.mxu0 0.0
        %908 = vmatpush1.msra.mxu0 0.0
        %909 = vmatprep.subr.mxu0 0.0
        %910 = vmatpush1.msra.mxu0 0.0
        %911 = vmatprep.subr.mxu0 0.0
        %912 = vmatpush1.msra.mxu0 0.0
        %913 = vmatprep.subr.mxu0 0.0
        %914 = vmatpush1.msra.mxu0 0.0
        %915 = vmatprep.subr.mxu0 0.0
        %916 = vmatpush1.msra.mxu0 0.0
        %917 = vmatprep.subr.mxu0 0.0
        %918 = vmatpush1.msra.mxu0 0.0
        %919 = vmatprep.subr.mxu0 0.0
        %920 = vmatpush1.msra.mxu0 0.0
        %921 = vmatprep.subr.mxu0 0.0
        %922 = vmatpush1.msra.mxu0 0.0
        %923 = vmatprep.subr.mxu0 0.0
        %924 = vmatpush1.msra.mxu0 0.0
        %925 = vmatprep.subr.mxu0 0.0
        %926 = vmatpush1.msra.mxu0 0.0
        %927 = vmatprep.subr.mxu0 0.0
        %928 = vmatpush1.msra.mxu0 0.0
        %929 = vmatprep.subr.mxu0 0.0
        %930 = vmatpush1.msra.mxu0 0.0
        %931 = vmatprep.subr.mxu0 0.0
        %932 = vmatpush1.msra.mxu0 0.0
        %933 = vmatprep.subr.mxu0 0.0
        %934 = vmatpush1.msra.mxu0 0.0
        %935 = vmatprep.subr.mxu0 0.0
        %936 = vmatpush1.msra.mxu0 0.0
        %937 = vmatprep.subr.mxu0 0.0
        %938 = vmatpush1.msra.mxu0 0.0
        %939 = vmatprep.subr.mxu0 0.0
        %940 = vmatpush1.msra.mxu0 0.0
        %941 = vmatprep.subr.mxu0 0.0
        %942 = vmatpush1.msra.mxu0 0.0
        %943 = vmatprep.mubr.f32.mxu0 0.0
        %944 = vmatmul.mubr.f32.gmra.mrb[0].mxu0 %v877
        %v945 = vpop.f32.mrb[0].mxu0
        %v946 = vadd.f32 0.0, %v945
        %v947 = vpop.f32.mrb[0].mxu0
        %948 = vdwg.mxu0
        %v950 = vsel %vm537, %v703, 0
        %952 = vmatprep.subr.mxu0 0.0
        %953 = vmatpush1.msra.mxu0 %v528
        %954 = vmatprep.subr.mxu0 0.0
        %955 = vmatpush1.msra.mxu0 %v529
        %956 = vmatprep.subr.mxu0 0.0
        %957 = vmatpush1.msra.mxu0 0.0
        %958 = vmatprep.subr.mxu0 0.0
        %959 = vmatpush1.msra.mxu0 0.0
        %960 = vmatprep.subr.mxu0 0.0
        %961 = vmatpush1.msra.mxu0 0.0
        %962 = vmatprep.subr.mxu0 0.0
        %963 = vmatpush1.msra.mxu0 0.0
        %964 = vmatprep.subr.mxu0 0.0
        %965 = vmatpush1.msra.mxu0 0.0
        %966 = vmatprep.subr.mxu0 0.0
        %967 = vmatpush1.msra.mxu0 0.0
        %968 = vmatprep.subr.mxu0 0.0
        %969 = vmatpush1.msra.mxu0 0.0
        %970 = vmatprep.subr.mxu0 0.0
        %971 = vmatpush1.msra.mxu0 0.0
        %972 = vmatprep.subr.mxu0 0.0
        %973 = vmatpush1.msra.mxu0 0.0
        %974 = vmatprep.subr.mxu0 0.0
        %975 = vmatpush1.msra.mxu0 0.0
        %976 = vmatprep.subr.mxu0 0.0
        %977 = vmatpush1.msra.mxu0 0.0
        %978 = vmatprep.subr.mxu0 0.0
        %979 = vmatpush1.msra.mxu0 0.0
        %980 = vmatprep.subr.mxu0 0.0
        %981 = vmatpush1.msra.mxu0 0.0
        %982 = vmatprep.subr.mxu0 0.0
        %983 = vmatpush1.msra.mxu0 0.0
        %984 = vmatprep.subr.mxu0 0.0
        %985 = vmatpush1.msra.mxu0 0.0
        %986 = vmatprep.subr.mxu0 0.0
        %987 = vmatpush1.msra.mxu0 0.0
        %988 = vmatprep.subr.mxu0 0.0
        %989 = vmatpush1.msra.mxu0 0.0
        %990 = vmatprep.subr.mxu0 0.0
        %991 = vmatpush1.msra.mxu0 0.0
        %992 = vmatprep.subr.mxu0 0.0
        %993 = vmatpush1.msra.mxu0 0.0
        %994 = vmatprep.subr.mxu0 0.0
        %995 = vmatpush1.msra.mxu0 0.0
        %996 = vmatprep.subr.mxu0 0.0
        %997 = vmatpush1.msra.mxu0 0.0
        %998 = vmatprep.subr.mxu0 0.0
        %999 = vmatpush1.msra.mxu0 0.0
        %1000 = vmatprep.subr.mxu0 0.0
        %1001 = vmatpush1.msra.mxu0 0.0
        %1002 = vmatprep.subr.mxu0 0.0
        %1003 = vmatpush1.msra.mxu0 0.0
        %1004 = vmatprep.subr.mxu0 0.0
        %1005 = vmatpush1.msra.mxu0 0.0
        %1006 = vmatprep.subr.mxu0 0.0
        %1007 = vmatpush1.msra.mxu0 0.0
        %1008 = vmatprep.subr.mxu0 0.0
        %1009 = vmatpush1.msra.mxu0 0.0
        %1010 = vmatprep.subr.mxu0 0.0
        %1011 = vmatpush1.msra.mxu0 0.0
        %1012 = vmatprep.subr.mxu0 0.0
        %1013 = vmatpush1.msra.mxu0 0.0
        %1014 = vmatprep.subr.mxu0 0.0
        %1015 = vmatpush1.msra.mxu0 0.0
        %1016 = vmatprep.mubr.f32.mxu0 0.0
        %1017 = vmatmul.mubr.f32.gmra.mrb[0].mxu0 %v950
        %v1018 = vpop.f32.mrb[0].mxu0
        %v1019 = vadd.f32 %v946, %v1018
        %v1020 = vpop.f32.mrb[0].mxu0
        %1021 = vdwg.mxu0
        %1022 = vst.msk [vmem:[#allocation2] sm:$0xff] %vm446, %v1019
        %s1023 = sld [smem:[#allocation5 + %s422]]
        %1025 = vrot.lane.b32.xlu0 %v525, 96
        %v1026 = vpop.permute.xlu0 %1025
        %v1027 = vsel %vm537, %v525, 0
        %v1029 = vsel %vm537, %v1026, 0
        %1031 = vmatprep.subr.mxu0 0.0
        %1032 = vmatpush1.xpose.msra.mxu0 %v1029
        %1033 = vmatprep.subr.mxu0 0.0
        %1034 = vmatpush1.xpose.msra.mxu0 0.0
        %1035 = vmatprep.subr.mxu0 0.0
        %1036 = vmatpush1.xpose.msra.mxu0 0.0
        %1037 = vmatprep.subr.mxu0 0.0
        %1038 = vmatpush1.xpose.msra.mxu0 0.0
        %1039 = vmatprep.subr.mxu0 0.0
        %1040 = vmatpush1.xpose.msra.mxu0 0.0
        %1041 = vmatprep.subr.mxu0 0.0
        %1042 = vmatpush1.xpose.msra.mxu0 0.0
        %1043 = vmatprep.subr.mxu0 0.0
        %1044 = vmatpush1.xpose.msra.mxu0 0.0
        %1045 = vmatprep.subr.mxu0 0.0
        %1046 = vmatpush1.xpose.msra.mxu0 0.0
        %1047 = vmatprep.subr.mxu0 0.0
        %1048 = vmatpush1.xpose.msra.mxu0 0.0
        %1049 = vmatprep.subr.mxu0 0.0
        %1050 = vmatpush1.xpose.msra.mxu0 0.0
        %1051 = vmatprep.subr.mxu0 0.0
        %1052 = vmatpush1.xpose.msra.mxu0 0.0
        %1053 = vmatprep.subr.mxu0 0.0
        %1054 = vmatpush1.xpose.msra.mxu0 0.0
        %1055 = vmatprep.subr.mxu0 0.0
        %1056 = vmatpush1.xpose.msra.mxu0 0.0
        %1057 = vmatprep.subr.mxu0 0.0
        %1058 = vmatpush1.xpose.msra.mxu0 0.0
        %1059 = vmatprep.subr.mxu0 0.0
        %1060 = vmatpush1.xpose.msra.mxu0 0.0
        %1061 = vmatprep.subr.mxu0 0.0
        %1062 = vmatpush1.xpose.msra.mxu0 0.0
        %1063 = vmatprep.subr.mxu0 0.0
        %1064 = vmatpush1.xpose.msra.mxu0 0.0
        %1065 = vmatprep.subr.mxu0 0.0
        %1066 = vmatpush1.xpose.msra.mxu0 0.0
        %1067 = vmatprep.subr.mxu0 0.0
        %1068 = vmatpush1.xpose.msra.mxu0 0.0
        %1069 = vmatprep.subr.mxu0 0.0
        %1070 = vmatpush1.xpose.msra.mxu0 0.0
        %1071 = vmatprep.subr.mxu0 0.0
        %1072 = vmatpush1.xpose.msra.mxu0 0.0
        %1073 = vmatprep.subr.mxu0 0.0
        %1074 = vmatpush1.xpose.msra.mxu0 0.0
        %1075 = vmatprep.subr.mxu0 0.0
        %1076 = vmatpush1.xpose.msra.mxu0 0.0
        %1077 = vmatprep.subr.mxu0 0.0
        %1078 = vmatpush1.xpose.msra.mxu0 0.0
        %1079 = vmatprep.subr.mxu0 0.0
        %1080 = vmatpush1.xpose.msra.mxu0 0.0
        %1081 = vmatprep.subr.mxu0 0.0
        %1082 = vmatpush1.xpose.msra.mxu0 0.0
        %1083 = vmatprep.subr.mxu0 0.0
        %1084 = vmatpush1.xpose.msra.mxu0 0.0
        %1085 = vmatprep.subr.mxu0 0.0
        %1086 = vmatpush1.xpose.msra.mxu0 0.0
        %1087 = vmatprep.subr.mxu0 0.0
        %1088 = vmatpush1.xpose.msra.mxu0 0.0
        %1089 = vmatprep.subr.mxu0 0.0
        %1090 = vmatpush1.xpose.msra.mxu0 0.0
        %1091 = vmatprep.subr.mxu0 0.0
        %1092 = vmatpush1.xpose.msra.mxu0 0.0
        %1093 = vmatprep.subr.mxu0 0.0
        %1094 = vmatpush1.xpose.msra.mxu0 0.0
        %1095 = vmatprep.mubr.f32.mxu0 0.0
        %1096 = vmatmul.mubr.f32.gmra.mrb[0].mxu0 %v1027
        %v1097 = vpop.f32.mrb[0].mxu0
        %v1098 = vadd.f32 0.0, %v1097
        %v1099 = vpop.f32.mrb[0].mxu0
        %1100 = vdwg.mxu0
        %v1101 = vmul.f32 %v1098, 0.25
        %v1102 = vstv %s1023
        %vm1103 = vcmp.lt.s32.totalorder %v533, %v1102
        %v1104 = vsel %vm1103, %v1101, -1e+30
        %v1105 = vsel %vm615, %v1104, -inf
        %1106 = vmax.xlane.f32.xlu0 %v1105
        %v1107 = vpop.xlane.xlu0 %1106
        %v1108 = vsub.f32 %v1104, %v1107
        %v1109 = vmul.f32 %v1108, 1.442695
        %v1110 = vpow.pop %v1109
        %v1111 = vsel %vm615, %v1110, 0.0
        %1112 = vadd.xlane.f32.xlu0 %v1111
        %v1113 = vpop.xlane.xlu0 %1112
        %v1114 = vrcp.pop %v1113
        %v1115 = vmul.f32 %v1110, %v1114
        %v1116 = vpack.c.bf16 %v1115, %v1115
        %s1117 = scalar_lea.vmem %s397, 4 [#allocation13]
        %1118 = vst.msk [vmem:[%s1117] sm:$0xf] %vm628, %v1116
        %1119 = vrot.lane.b32.xlu0 %v525, 64
        %v1120 = vpop.permute.xlu0 %1119
        %v1123 = vsel %vm615, %v1115, 0
        %1125 = vmatprep.subr.mxu0 0.0
        %1126 = vmatpush1.msra.mxu0 %v1120
        %1127 = vmatprep.subr.mxu0 0.0
        %1128 = vmatpush1.msra.mxu0 0.0
        %1129 = vmatprep.subr.mxu0 0.0
        %1130 = vmatpush1.msra.mxu0 0.0
        %1131 = vmatprep.subr.mxu0 0.0
        %1132 = vmatpush1.msra.mxu0 0.0
        %1133 = vmatprep.subr.mxu0 0.0
        %1134 = vmatpush1.msra.mxu0 0.0
        %1135 = vmatprep.subr.mxu0 0.0
        %1136 = vmatpush1.msra.mxu0 0.0
        %1137 = vmatprep.subr.mxu0 0.0
        %1138 = vmatpush1.msra.mxu0 0.0
        %1139 = vmatprep.subr.mxu0 0.0
        %1140 = vmatpush1.msra.mxu0 0.0
        %1141 = vmatprep.subr.mxu0 0.0
        %1142 = vmatpush1.msra.mxu0 0.0
        %1143 = vmatprep.subr.mxu0 0.0
        %1144 = vmatpush1.msra.mxu0 0.0
        %1145 = vmatprep.subr.mxu0 0.0
        %1146 = vmatpush1.msra.mxu0 0.0
        %1147 = vmatprep.subr.mxu0 0.0
        %1148 = vmatpush1.msra.mxu0 0.0
        %1149 = vmatprep.subr.mxu0 0.0
        %1150 = vmatpush1.msra.mxu0 0.0
        %1151 = vmatprep.subr.mxu0 0.0
        %1152 = vmatpush1.msra.mxu0 0.0
        %1153 = vmatprep.subr.mxu0 0.0
        %1154 = vmatpush1.msra.mxu0 0.0
        %1155 = vmatprep.subr.mxu0 0.0
        %1156 = vmatpush1.msra.mxu0 0.0
        %1157 = vmatprep.subr.mxu0 0.0
        %1158 = vmatpush1.msra.mxu0 0.0
        %1159 = vmatprep.subr.mxu0 0.0
        %1160 = vmatpush1.msra.mxu0 0.0
        %1161 = vmatprep.subr.mxu0 0.0
        %1162 = vmatpush1.msra.mxu0 0.0
        %1163 = vmatprep.subr.mxu0 0.0
        %1164 = vmatpush1.msra.mxu0 0.0
        %1165 = vmatprep.subr.mxu0 0.0
        %1166 = vmatpush1.msra.mxu0 0.0
        %1167 = vmatprep.subr.mxu0 0.0
        %1168 = vmatpush1.msra.mxu0 0.0
        %1169 = vmatprep.subr.mxu0 0.0
        %1170 = vmatpush1.msra.mxu0 0.0
        %1171 = vmatprep.subr.mxu0 0.0
        %1172 = vmatpush1.msra.mxu0 0.0
        %1173 = vmatprep.subr.mxu0 0.0
        %1174 = vmatpush1.msra.mxu0 0.0
        %1175 = vmatprep.subr.mxu0 0.0
        %1176 = vmatpush1.msra.mxu0 0.0
        %1177 = vmatprep.subr.mxu0 0.0
        %1178 = vmatpush1.msra.mxu0 0.0
        %1179 = vmatprep.subr.mxu0 0.0
        %1180 = vmatpush1.msra.mxu0 0.0
        %1181 = vmatprep.subr.mxu0 0.0
        %1182 = vmatpush1.msra.mxu0 0.0
        %1183 = vmatprep.subr.mxu0 0.0
        %1184 = vmatpush1.msra.mxu0 0.0
        %1185 = vmatprep.subr.mxu0 0.0
        %1186 = vmatpush1.msra.mxu0 0.0
        %1187 = vmatprep.subr.mxu0 0.0
        %1188 = vmatpush1.msra.mxu0 0.0
        %1189 = vmatprep.mubr.f32.mxu0 0.0
        %1190 = vmatmul.mubr.f32.gmra.mrb[0].mxu0 %v1123
        %v1191 = vpop.f32.mrb[0].mxu0
        %v1192 = vadd.f32 0.0, %v1191
        %v1193 = vpop.f32.mrb[0].mxu0
        %1194 = vdwg.mxu0
        %1195 = vrot.lane.b32.xlu0 %v525, 112
        %v1196 = vpop.permute.xlu0 %1195
        %1197 = vrot.lane.b32.xlu0 %v525, 80
        %v1198 = vpop.permute.xlu0 %1197
        %v1199 = vsel %vm537, %v1196, 0
        %v1201 = vsel %vm537, %v1198, 0
        %1203 = vmatprep.subr.mxu0 0.0
        %1204 = vmatpush1.xpose.msra.mxu0 %v1201
        %1205 = vmatprep.subr.mxu0 0.0
        %1206 = vmatpush1.xpose.msra.mxu0 0.0
        %1207 = vmatprep.subr.mxu0 0.0
        %1208 = vmatpush1.xpose.msra.mxu0 0.0
        %1209 = vmatprep.subr.mxu0 0.0
        %1210 = vmatpush1.xpose.msra.mxu0 0.0
        %1211 = vmatprep.subr.mxu0 0.0
        %1212 = vmatpush1.xpose.msra.mxu0 0.0
        %1213 = vmatprep.subr.mxu0 0.0
        %1214 = vmatpush1.xpose.msra.mxu0 0.0
        %1215 = vmatprep.subr.mxu0 0.0
        %1216 = vmatpush1.xpose.msra.mxu0 0.0
        %1217 = vmatprep.subr.mxu0 0.0
        %1218 = vmatpush1.xpose.msra.mxu0 0.0
        %1219 = vmatprep.subr.mxu0 0.0
        %1220 = vmatpush1.xpose.msra.mxu0 0.0
        %1221 = vmatprep.subr.mxu0 0.0
        %1222 = vmatpush1.xpose.msra.mxu0 0.0
        %1223 = vmatprep.subr.mxu0 0.0
        %1224 = vmatpush1.xpose.msra.mxu0 0.0
        %1225 = vmatprep.subr.mxu0 0.0
        %1226 = vmatpush1.xpose.msra.mxu0 0.0
        %1227 = vmatprep.subr.mxu0 0.0
        %1228 = vmatpush1.xpose.msra.mxu0 0.0
        %1229 = vmatprep.subr.mxu0 0.0
        %1230 = vmatpush1.xpose.msra.mxu0 0.0
        %1231 = vmatprep.subr.mxu0 0.0
        %1232 = vmatpush1.xpose.msra.mxu0 0.0
        %1233 = vmatprep.subr.mxu0 0.0
        %1234 = vmatpush1.xpose.msra.mxu0 0.0
        %1235 = vmatprep.subr.mxu0 0.0
        %1236 = vmatpush1.xpose.msra.mxu0 0.0
        %1237 = vmatprep.subr.mxu0 0.0
        %1238 = vmatpush1.xpose.msra.mxu0 0.0
        %1239 = vmatprep.subr.mxu0 0.0
        %1240 = vmatpush1.xpose.msra.mxu0 0.0
        %1241 = vmatprep.subr.mxu0 0.0
        %1242 = vmatpush1.xpose.msra.mxu0 0.0
        %1243 = vmatprep.subr.mxu0 0.0
        %1244 = vmatpush1.xpose.msra.mxu0 0.0
        %1245 = vmatprep.subr.mxu0 0.0
        %1246 = vmatpush1.xpose.msra.mxu0 0.0
        %1247 = vmatprep.subr.mxu0 0.0
        %1248 = vmatpush1.xpose.msra.mxu0 0.0
        %1249 = vmatprep.subr.mxu0 0.0
        %1250 = vmatpush1.xpose.msra.mxu0 0.0
        %1251 = vmatprep.subr.mxu0 0.0
        %1252 = vmatpush1.xpose.msra.mxu0 0.0
        %1253 = vmatprep.subr.mxu0 0.0
        %1254 = vmatpush1.xpose.msra.mxu0 0.0
        %1255 = vmatprep.subr.mxu0 0.0
        %1256 = vmatpush1.xpose.msra.mxu0 0.0
        %1257 = vmatprep.subr.mxu0 0.0
        %1258 = vmatpush1.xpose.msra.mxu0 0.0
        %1259 = vmatprep.subr.mxu0 0.0
        %1260 = vmatpush1.xpose.msra.mxu0 0.0
        %1261 = vmatprep.subr.mxu0 0.0
        %1262 = vmatpush1.xpose.msra.mxu0 0.0
        %1263 = vmatprep.subr.mxu0 0.0
        %1264 = vmatpush1.xpose.msra.mxu0 0.0
        %1265 = vmatprep.subr.mxu0 0.0
        %1266 = vmatpush1.xpose.msra.mxu0 0.0
        %1267 = vmatprep.mubr.f32.mxu0 0.0
        %1268 = vmatmul.mubr.f32.gmra.mrb[0].mxu0 %v1199
        %v1269 = vpop.f32.mrb[0].mxu0
        %v1270 = vadd.f32 0.0, %v1269
        %v1271 = vpop.f32.mrb[0].mxu0
        %1272 = vdwg.mxu0
        %v1273 = vmul.f32 %v1270, 0.25
        %v1274 = vsel %vm1103, %v1273, -1e+30
        %v1275 = vsel %vm615, %v1274, -inf
        %1276 = vmax.xlane.f32.xlu0 %v1275
        %v1277 = vpop.xlane.xlu0 %1276
        %v1278 = vsub.f32 %v1274, %v1277
        %v1279 = vmul.f32 %v1278, 1.442695
        %v1280 = vpow.pop %v1279
        %v1281 = vsel %vm615, %v1280, 0.0
        %1282 = vadd.xlane.f32.xlu0 %v1281
        %v1283 = vpop.xlane.xlu0 %1282
        %v1284 = vrcp.pop %v1283
        %v1285 = vmul.f32 %v1280, %v1284
        %v1286 = vpack.c.bf16 %v1285, %v1285
        %s1287 = scalar_lea.vmem %s397, 12 [#allocation13]
        %1288 = vst.msk [vmem:[%s1287] sm:$0xf] %vm628, %v1286
        %1289 = vrot.lane.b32.xlu0 %v525, 48
        %v1290 = vpop.permute.xlu0 %1289
        %v1293 = vsel %vm615, %v1285, 0
        %1295 = vmatprep.subr.mxu0 0.0
        %1296 = vmatpush1.msra.mxu0 %v1290
        %1297 = vmatprep.subr.mxu0 0.0
        %1298 = vmatpush1.msra.mxu0 0.0
        %1299 = vmatprep.subr.mxu0 0.0
        %1300 = vmatpush1.msra.mxu0 0.0
        %1301 = vmatprep.subr.mxu0 0.0
        %1302 = vmatpush1.msra.mxu0 0.0
        %1303 = vmatprep.subr.mxu0 0.0
        %1304 = vmatpush1.msra.mxu0 0.0
        %1305 = vmatprep.subr.mxu0 0.0
        %1306 = vmatpush1.msra.mxu0 0.0
        %1307 = vmatprep.subr.mxu0 0.0
        %1308 = vmatpush1.msra.mxu0 0.0
        %1309 = vmatprep.subr.mxu0 0.0
        %1310 = vmatpush1.msra.mxu0 0.0
        %1311 = vmatprep.subr.mxu0 0.0
        %1312 = vmatpush1.msra.mxu0 0.0
        %1313 = vmatprep.subr.mxu0 0.0
        %1314 = vmatpush1.msra.mxu0 0.0
        %1315 = vmatprep.subr.mxu0 0.0
        %1316 = vmatpush1.msra.mxu0 0.0
        %1317 = vmatprep.subr.mxu0 0.0
        %1318 = vmatpush1.msra.mxu0 0.0
        %1319 = vmatprep.subr.mxu0 0.0
        %1320 = vmatpush1.msra.mxu0 0.0
        %1321 = vmatprep.subr.mxu0 0.0
        %1322 = vmatpush1.msra.mxu0 0.0
        %1323 = vmatprep.subr.mxu0 0.0
        %1324 = vmatpush1.msra.mxu0 0.0
        %1325 = vmatprep.subr.mxu0 0.0
        %1326 = vmatpush1.msra.mxu0 0.0
        %1327 = vmatprep.subr.mxu0 0.0
        %1328 = vmatpush1.msra.mxu0 0.0
        %1329 = vmatprep.subr.mxu0 0.0
        %1330 = vmatpush1.msra.mxu0 0.0
        %1331 = vmatprep.subr.mxu0 0.0
        %1332 = vmatpush1.msra.mxu0 0.0
        %1333 = vmatprep.subr.mxu0 0.0
        %1334 = vmatpush1.msra.mxu0 0.0
        %1335 = vmatprep.subr.mxu0 0.0
        %1336 = vmatpush1.msra.mxu0 0.0
        %1337 = vmatprep.subr.mxu0 0.0
        %1338 = vmatpush1.msra.mxu0 0.0
        %1339 = vmatprep.subr.mxu0 0.0
        %1340 = vmatpush1.msra.mxu0 0.0
        %1341 = vmatprep.subr.mxu0 0.0
        %1342 = vmatpush1.msra.mxu0 0.0
        %1343 = vmatprep.subr.mxu0 0.0
        %1344 = vmatpush1.msra.mxu0 0.0
        %1345 = vmatprep.subr.mxu0 0.0
        %1346 = vmatpush1.msra.mxu0 0.0
        %1347 = vmatprep.subr.mxu0 0.0
        %1348 = vmatpush1.msra.mxu0 0.0
        %1349 = vmatprep.subr.mxu0 0.0
        %1350 = vmatpush1.msra.mxu0 0.0
        %1351 = vmatprep.subr.mxu0 0.0
        %1352 = vmatpush1.msra.mxu0 0.0
        %1353 = vmatprep.subr.mxu0 0.0
        %1354 = vmatpush1.msra.mxu0 0.0
        %1355 = vmatprep.subr.mxu0 0.0
        %1356 = vmatpush1.msra.mxu0 0.0
        %1357 = vmatprep.subr.mxu0 0.0
        %1358 = vmatpush1.msra.mxu0 0.0
        %1359 = vmatprep.mubr.f32.mxu0 0.0
        %1360 = vmatmul.mubr.f32.gmra.mrb[0].mxu0 %v1293
        %v1361 = vpop.f32.mrb[0].mxu0
        %v1362 = vadd.f32 0.0, %v1361
        %v1363 = vpop.f32.mrb[0].mxu0
        %1364 = vdwg.mxu0
        %v1366 = vsel %vm537, %v1362, 0
        %1368 = vmatprep.subr.mxu0 0.0
        %1369 = vmatpush1.msra.mxu0 %v530
        %1370 = vmatprep.subr.mxu0 0.0
        %1371 = vmatpush1.msra.mxu0 %v531
        %1372 = vmatprep.subr.mxu0 0.0
        %1373 = vmatpush1.msra.mxu0 0.0
        %1374 = vmatprep.subr.mxu0 0.0
        %1375 = vmatpush1.msra.mxu0 0.0
        %1376 = vmatprep.subr.mxu0 0.0
        %1377 = vmatpush1.msra.mxu0 0.0
        %1378 = vmatprep.subr.mxu0 0.0
        %1379 = vmatpush1.msra.mxu0 0.0
        %1380 = vmatprep.subr.mxu0 0.0
        %1381 = vmatpush1.msra.mxu0 0.0
        %1382 = vmatprep.subr.mxu0 0.0
        %1383 = vmatpush1.msra.mxu0 0.0
        %1384 = vmatprep.subr.mxu0 0.0
        %1385 = vmatpush1.msra.mxu0 0.0
        %1386 = vmatprep.subr.mxu0 0.0
        %1387 = vmatpush1.msra.mxu0 0.0
        %1388 = vmatprep.subr.mxu0 0.0
        %1389 = vmatpush1.msra.mxu0 0.0
        %1390 = vmatprep.subr.mxu0 0.0
        %1391 = vmatpush1.msra.mxu0 0.0
        %1392 = vmatprep.subr.mxu0 0.0
        %1393 = vmatpush1.msra.mxu0 0.0
        %1394 = vmatprep.subr.mxu0 0.0
        %1395 = vmatpush1.msra.mxu0 0.0
        %1396 = vmatprep.subr.mxu0 0.0
        %1397 = vmatpush1.msra.mxu0 0.0
        %1398 = vmatprep.subr.mxu0 0.0
        %1399 = vmatpush1.msra.mxu0 0.0
        %1400 = vmatprep.subr.mxu0 0.0
        %1401 = vmatpush1.msra.mxu0 0.0
        %1402 = vmatprep.subr.mxu0 0.0
        %1403 = vmatpush1.msra.mxu0 0.0
        %1404 = vmatprep.subr.mxu0 0.0
        %1405 = vmatpush1.msra.mxu0 0.0
        %1406 = vmatprep.subr.mxu0 0.0
        %1407 = vmatpush1.msra.mxu0 0.0
        %1408 = vmatprep.subr.mxu0 0.0
        %1409 = vmatpush1.msra.mxu0 0.0
        %1410 = vmatprep.subr.mxu0 0.0
        %1411 = vmatpush1.msra.mxu0 0.0
        %1412 = vmatprep.subr.mxu0 0.0
        %1413 = vmatpush1.msra.mxu0 0.0
        %1414 = vmatprep.subr.mxu0 0.0
        %1415 = vmatpush1.msra.mxu0 0.0
        %1416 = vmatprep.subr.mxu0 0.0
        %1417 = vmatpush1.msra.mxu0 0.0
        %1418 = vmatprep.subr.mxu0 0.0
        %1419 = vmatpush1.msra.mxu0 0.0
        %1420 = vmatprep.subr.mxu0 0.0
        %1421 = vmatpush1.msra.mxu0 0.0
        %1422 = vmatprep.subr.mxu0 0.0
        %1423 = vmatpush1.msra.mxu0 0.0
        %1424 = vmatprep.subr.mxu0 0.0
        %1425 = vmatpush1.msra.mxu0 0.0
        %1426 = vmatprep.subr.mxu0 0.0
        %1427 = vmatpush1.msra.mxu0 0.0
        %1428 = vmatprep.subr.mxu0 0.0
        %1429 = vmatpush1.msra.mxu0 0.0
        %1430 = vmatprep.subr.mxu0 0.0
        %1431 = vmatpush1.msra.mxu0 0.0
        %1432 = vmatprep.mubr.f32.mxu0 0.0
        %1433 = vmatmul.mubr.f32.gmra.mrb[0].mxu0 %v1366
        %v1434 = vpop.f32.mrb[0].mxu0
        %v1435 = vadd.f32 0.0, %v1434
        %v1436 = vpop.f32.mrb[0].mxu0
        %1437 = vdwg.mxu0
        %v1439 = vsel %vm537, %v1192, 0
        %1441 = vmatprep.subr.mxu0 0.0
        %1442 = vmatpush1.msra.mxu0 %v528
        %1443 = vmatprep.subr.mxu0 0.0
        %1444 = vmatpush1.msra.mxu0 %v529
        %1445 = vmatprep.subr.mxu0 0.0
        %1446 = vmatpush1.msra.mxu0 0.0
        %1447 = vmatprep.subr.mxu0 0.0
        %1448 = vmatpush1.msra.mxu0 0.0
        %1449 = vmatprep.subr.mxu0 0.0
        %1450 = vmatpush1.msra.mxu0 0.0
        %1451 = vmatprep.subr.mxu0 0.0
        %1452 = vmatpush1.msra.mxu0 0.0
        %1453 = vmatprep.subr.mxu0 0.0
        %1454 = vmatpush1.msra.mxu0 0.0
        %1455 = vmatprep.subr.mxu0 0.0
        %1456 = vmatpush1.msra.mxu0 0.0
        %1457 = vmatprep.subr.mxu0 0.0
        %1458 = vmatpush1.msra.mxu0 0.0
        %1459 = vmatprep.subr.mxu0 0.0
        %1460 = vmatpush1.msra.mxu0 0.0
        %1461 = vmatprep.subr.mxu0 0.0
        %1462 = vmatpush1.msra.mxu0 0.0
        %1463 = vmatprep.subr.mxu0 0.0
        %1464 = vmatpush1.msra.mxu0 0.0
        %1465 = vmatprep.subr.mxu0 0.0
        %1466 = vmatpush1.msra.mxu0 0.0
        %1467 = vmatprep.subr.mxu0 0.0
        %1468 = vmatpush1.msra.mxu0 0.0
        %1469 = vmatprep.subr.mxu0 0.0
        %1470 = vmatpush1.msra.mxu0 0.0
        %1471 = vmatprep.subr.mxu0 0.0
        %1472 = vmatpush1.msra.mxu0 0.0
        %1473 = vmatprep.subr.mxu0 0.0
        %1474 = vmatpush1.msra.mxu0 0.0
        %1475 = vmatprep.subr.mxu0 0.0
        %1476 = vmatpush1.msra.mxu0 0.0
        %1477 = vmatprep.subr.mxu0 0.0
        %1478 = vmatpush1.msra.mxu0 0.0
        %1479 = vmatprep.subr.mxu0 0.0
        %1480 = vmatpush1.msra.mxu0 0.0
        %1481 = vmatprep.subr.mxu0 0.0
        %1482 = vmatpush1.msra.mxu0 0.0
        %1483 = vmatprep.subr.mxu0 0.0
        %1484 = vmatpush1.msra.mxu0 0.0
        %1485 = vmatprep.subr.mxu0 0.0
        %1486 = vmatpush1.msra.mxu0 0.0
        %1487 = vmatprep.subr.mxu0 0.0
        %1488 = vmatpush1.msra.mxu0 0.0
        %1489 = vmatprep.subr.mxu0 0.0
        %1490 = vmatpush1.msra.mxu0 0.0
        %1491 = vmatprep.subr.mxu0 0.0
        %1492 = vmatpush1.msra.mxu0 0.0
        %1493 = vmatprep.subr.mxu0 0.0
        %1494 = vmatpush1.msra.mxu0 0.0
        %1495 = vmatprep.subr.mxu0 0.0
        %1496 = vmatpush1.msra.mxu0 0.0
        %1497 = vmatprep.subr.mxu0 0.0
        %1498 = vmatpush1.msra.mxu0 0.0
        %1499 = vmatprep.subr.mxu0 0.0
        %1500 = vmatpush1.msra.mxu0 0.0
        %1501 = vmatprep.subr.mxu0 0.0
        %1502 = vmatpush1.msra.mxu0 0.0
        %1503 = vmatprep.subr.mxu0 0.0
        %1504 = vmatpush1.msra.mxu0 0.0
        %1505 = vmatprep.mubr.f32.mxu0 0.0
        %1506 = vmatmul.mubr.f32.gmra.mrb[0].mxu0 %v1439
        %v1507 = vpop.f32.mrb[0].mxu0
        %v1508 = vadd.f32 %v1435, %v1507
        %v1509 = vpop.f32.mrb[0].mxu0
        %1510 = vdwg.mxu0
        %1511 = vst.msk [vmem:[#allocation2 + $0x8] sm:$0xff] %vm446, %v1508
        %v1512 = vld [vmem:[#allocation2] sm:$0xff]
        %v1513 = vld [vmem:[#allocation2 + $0x8] sm:$0xff]
        %v1514 = vlaneseq
        %v1515 = vshrl.u32 %v1514, 7
        %v1516 = vsub.s32 0, %v1515
        %v1517 = vrot.slane %v403, %v1516
        %v1518 = vadd.f32 %v1512, %v1517
        %v1519 = vadd.f32 %v1513, %v1517
        %v1520 = vadd.f32 %v1518, %v401
        %v1521 = vadd.f32 %v1519, %v402
        %v1522 = vsel %vm446, %v1520, 0.0
        %1523 = vadd.xlane.f32.xlu0 %v1522
        %v1524 = vpop.xlane.xlu0 %1523
        %v1525 = vsel %vm446, %v1521, 0.0
        %1526 = vadd.xlane.f32.xlu0 %v1525
        %v1527 = vpop.xlane.xlu0 %1526
        %v1528 = vrcp.pop 32.0
        %v1529 = vmul.f32 %v1524, %v1528
        %v1530 = vmul.f32 %v1527, %v1528
        %v1531 = vsub.f32 %v1520, %v1529
        %v1532 = vsub.f32 %v1521, %v1530
        %v1533 = vmul.f32 %v1531, %v1531
        %v1534 = vmul.f32 %v1532, %v1532
        %v1535 = vsel %vm446, %v1533, 0.0
        %1536 = vadd.xlane.f32.xlu0 %v1535
        %v1537 = vpop.xlane.xlu0 %1536
        %v1538 = vsel %vm446, %v1534, 0.0
        %1539 = vadd.xlane.f32.xlu0 %v1538
        %v1540 = vpop.xlane.xlu0 %1539
        %v1541 = vmul.f32 %v1537, %v1528
        %v1542 = vmul.f32 %v1540, %v1528
        %v1543 = vadd.f32 %v1541, 1e-05
        %v1544 = vadd.f32 %v1542, 1e-05
        %v1545 = vrsqrt.pop %v1543
        %v1546 = vrsqrt.pop %v1544
        %v1547 = vmul.f32 %v1531, %v1545
        %v1548 = vmul.f32 %v1532, %v1546
        %v1549 = vlaneseq
        %v1550 = vshrl.u32 %v1549, 7
        %v1551 = vsub.s32 1, %v1550
        %v1552 = vrot.slane %v403, %v1551
        %v1553 = vmul.f32 %v1547, %v1552
        %v1554 = vmul.f32 %v1548, %v1552
        %v1555 = vlaneseq
        %v1556 = vshrl.u32 %v1555, 7
        %v1557 = vsub.s32 2, %v1556
        %v1558 = vrot.slane %v403, %v1557
        %v1559 = vadd.f32 %v1553, %v1558
        %v1560 = vadd.f32 %v1554, %v1558
        %v1561 = vmul.f32 %v1559, %v433
        %v1562 = vmul.f32 %v1560, %v434
        %v1563 = vld [vmem:[%s5] sm:$0xff]
        %v1564 = vld [vmem:[%s5 + $0x8] sm:$0xff]
        %v1565 = vld [vmem:[%s5 + $0x10] sm:$0xff]
        %v1566 = vld [vmem:[%s5 + $0x18] sm:$0xff]
        %v1568 = vsel %vm446, %v1561, 0
        %v1571 = vsel %vm446, %v1562, 0
        %1573 = vmatprep.subr.mxu0 0.0
        %1574 = vmatpush1.msra.mxu0 %v1563
        %1575 = vmatprep.subr.mxu0 0.0
        %1576 = vmatpush1.msra.mxu0 %v1564
        %1577 = vmatprep.subr.mxu0 0.0
        %1578 = vmatpush1.msra.mxu0 %v1565
        %1579 = vmatprep.subr.mxu0 0.0
        %1580 = vmatpush1.msra.mxu0 %v1566
        %1581 = vmatprep.subr.mxu0 0.0
        %1582 = vmatpush1.msra.mxu0 0.0
        %1583 = vmatprep.subr.mxu0 0.0
        %1584 = vmatpush1.msra.mxu0 0.0
        %1585 = vmatprep.subr.mxu0 0.0
        %1586 = vmatpush1.msra.mxu0 0.0
        %1587 = vmatprep.subr.mxu0 0.0
        %1588 = vmatpush1.msra.mxu0 0.0
        %1589 = vmatprep.subr.mxu0 0.0
        %1590 = vmatpush1.msra.mxu0 0.0
        %1591 = vmatprep.subr.mxu0 0.0
        %1592 = vmatpush1.msra.mxu0 0.0
        %1593 = vmatprep.subr.mxu0 0.0
        %1594 = vmatpush1.msra.mxu0 0.0
        %1595 = vmatprep.subr.mxu0 0.0
        %1596 = vmatpush1.msra.mxu0 0.0
        %1597 = vmatprep.subr.mxu0 0.0
        %1598 = vmatpush1.msra.mxu0 0.0
        %1599 = vmatprep.subr.mxu0 0.0
        %1600 = vmatpush1.msra.mxu0 0.0
        %1601 = vmatprep.subr.mxu0 0.0
        %1602 = vmatpush1.msra.mxu0 0.0
        %1603 = vmatprep.subr.mxu0 0.0
        %1604 = vmatpush1.msra.mxu0 0.0
        %1605 = vmatprep.subr.mxu0 0.0
        %1606 = vmatpush1.msra.mxu0 0.0
        %1607 = vmatprep.subr.mxu0 0.0
        %1608 = vmatpush1.msra.mxu0 0.0
        %1609 = vmatprep.subr.mxu0 0.0
        %1610 = vmatpush1.msra.mxu0 0.0
        %1611 = vmatprep.subr.mxu0 0.0
        %1612 = vmatpush1.msra.mxu0 0.0
        %1613 = vmatprep.subr.mxu0 0.0
        %1614 = vmatpush1.msra.mxu0 0.0
        %1615 = vmatprep.subr.mxu0 0.0
        %1616 = vmatpush1.msra.mxu0 0.0
        %1617 = vmatprep.subr.mxu0 0.0
        %1618 = vmatpush1.msra.mxu0 0.0
        %1619 = vmatprep.subr.mxu0 0.0
        %1620 = vmatpush1.msra.mxu0 0.0
        %1621 = vmatprep.subr.mxu0 0.0
        %1622 = vmatpush1.msra.mxu0 0.0
        %1623 = vmatprep.subr.mxu0 0.0
        %1624 = vmatpush1.msra.mxu0 0.0
        %1625 = vmatprep.subr.mxu0 0.0
        %1626 = vmatpush1.msra.mxu0 0.0
        %1627 = vmatprep.subr.mxu0 0.0
        %1628 = vmatpush1.msra.mxu0 0.0
        %1629 = vmatprep.subr.mxu0 0.0
        %1630 = vmatpush1.msra.mxu0 0.0
        %1631 = vmatprep.subr.mxu0 0.0
        %1632 = vmatpush1.msra.mxu0 0.0
        %1633 = vmatprep.subr.mxu0 0.0
        %1634 = vmatpush1.msra.mxu0 0.0
        %1635 = vmatprep.subr.mxu0 0.0
        %1636 = vmatpush1.msra.mxu0 0.0
        %1637 = vmatprep.mubr.f32.mxu0 0.0
        %1638 = vmatmul.mubr.f32.gmra.mrb[0].mxu0 %v1568
        %v1639 = vpop.f32.mrb[0].mxu0
        %v1640 = vadd.f32 0.0, %v1639
        %v1641 = vpop.f32.mrb[0].mxu0
        %1642 = vmatprep.mubr.f32.mxu0 0.0
        %1643 = vmatmul.mubr.f32.gmra.mrb[0].mxu0 %v1571
        %v1644 = vpop.f32.mrb[0].mxu0
        %v1645 = vadd.f32 0.0, %v1644
        %v1646 = vpop.f32.mrb[0].mxu0
        %1647 = vdwg.mxu0
        %vm1648 = vcmask 523264
        %1649 = vst.msk [vmem:[#allocation3 + $0x8] sm:$0xff] %vm1648, %v1640
        %1650 = vst.msk [vmem:[#allocation3 + $0x10] sm:$0xff] %vm1648, %v1645
        %v1651 = vld [vmem:[#allocation3 + $0x7] sm:$0xff]
        %v1652 = vld [vmem:[#allocation3 + $0xf] sm:$0xff]
        %v1653 = vadd.s32 %v413, 4294967295
        %v1654 = vadd.s32 %v414, 4294967295
        %vm1655 = vcmp.ge.s32.totalorder %v1653, 0
        %vm1656 = vcmp.ge.s32.totalorder %v1654, 0
        %vm1657 = vcmp.lt.s32.totalorder %v1653, 8
        %vm1658 = vcmp.lt.s32.totalorder %v1654, 8
        %vm1659 = vmand %vm1655, %vm1657
        %vm1660 = vmand %vm1656, %vm1658
        %v1661 = vsel %vm1659, 1, 0
        %v1662 = vsel %vm1660, 1, 0
        %vm1663 = vcmp.eq.s32.totalorder %v1661, 1
        %vm1664 = vcmp.eq.s32.totalorder %v1662, 1
        %v1665 = vsel %vm1663, %v1651, 0.0
        %v1666 = vsel %vm1664, %v1652, 0.0
        %v1667 = vadd.f32 %v1665, 0.0
        %v1668 = vadd.f32 %v1666, 0.0
        %s1669 = scalar_lea.vmem %s5, 32
        %v1670 = vld [vmem:[%s1669] sm:$0xff]
        %v1671 = vld [vmem:[%s1669 + $0x8] sm:$0xff]
        %v1672 = vld [vmem:[%s1669 + $0x10] sm:$0xff]
        %v1673 = vld [vmem:[%s1669 + $0x18] sm:$0xff]
        %1674 = vmatprep.subr.mxu0 0.0
        %1675 = vmatpush1.msra.mxu0 %v1670
        %1676 = vmatprep.subr.mxu0 0.0
        %1677 = vmatpush1.msra.mxu0 %v1671
        %1678 = vmatprep.subr.mxu0 0.0
        %1679 = vmatpush1.msra.mxu0 %v1672
        %1680 = vmatprep.subr.mxu0 0.0
        %1681 = vmatpush1.msra.mxu0 %v1673
        %1682 = vmatprep.subr.mxu0 0.0
        %1683 = vmatpush1.msra.mxu0 0.0
        %1684 = vmatprep.subr.mxu0 0.0
        %1685 = vmatpush1.msra.mxu0 0.0
        %1686 = vmatprep.subr.mxu0 0.0
        %1687 = vmatpush1.msra.mxu0 0.0
        %1688 = vmatprep.subr.mxu0 0.0
        %1689 = vmatpush1.msra.mxu0 0.0
        %1690 = vmatprep.subr.mxu0 0.0
        %1691 = vmatpush1.msra.mxu0 0.0
        %1692 = vmatprep.subr.mxu0 0.0
        %1693 = vmatpush1.msra.mxu0 0.0
        %1694 = vmatprep.subr.mxu0 0.0
        %1695 = vmatpush1.msra.mxu0 0.0
        %1696 = vmatprep.subr.mxu0 0.0
        %1697 = vmatpush1.msra.mxu0 0.0
        %1698 = vmatprep.subr.mxu0 0.0
        %1699 = vmatpush1.msra.mxu0 0.0
        %1700 = vmatprep.subr.mxu0 0.0
        %1701 = vmatpush1.msra.mxu0 0.0
        %1702 = vmatprep.subr.mxu0 0.0
        %1703 = vmatpush1.msra.mxu0 0.0
        %1704 = vmatprep.subr.mxu0 0.0
        %1705 = vmatpush1.msra.mxu0 0.0
        %1706 = vmatprep.subr.mxu0 0.0
        %1707 = vmatpush1.msra.mxu0 0.0
        %1708 = vmatprep.subr.mxu0 0.0
        %1709 = vmatpush1.msra.mxu0 0.0
        %1710 = vmatprep.subr.mxu0 0.0
        %1711 = vmatpush1.msra.mxu0 0.0
        %1712 = vmatprep.subr.mxu0 0.0
        %1713 = vmatpush1.msra.mxu0 0.0
        %1714 = vmatprep.subr.mxu0 0.0
        %1715 = vmatpush1.msra.mxu0 0.0
        %1716 = vmatprep.subr.mxu0 0.0
        %1717 = vmatpush1.msra.mxu0 0.0
        %1718 = vmatprep.subr.mxu0 0.0
        %1719 = vmatpush1.msra.mxu0 0.0
        %1720 = vmatprep.subr.mxu0 0.0
        %1721 = vmatpush1.msra.mxu0 0.0
        %1722 = vmatprep.subr.mxu0 0.0
        %1723 = vmatpush1.msra.mxu0 0.0
        %1724 = vmatprep.subr.mxu0 0.0
        %1725 = vmatpush1.msra.mxu0 0.0
        %1726 = vmatprep.subr.mxu0 0.0
        %1727 = vmatpush1.msra.mxu0 0.0
        %1728 = vmatprep.subr.mxu0 0.0
        %1729 = vmatpush1.msra.mxu0 0.0
        %1730 = vmatprep.subr.mxu0 0.0
        %1731 = vmatpush1.msra.mxu0 0.0
        %1732 = vmatprep.subr.mxu0 0.0
        %1733 = vmatpush1.msra.mxu0 0.0
        %1734 = vmatprep.subr.mxu0 0.0
        %1735 = vmatpush1.msra.mxu0 0.0
        %1736 = vmatprep.subr.mxu0 0.0
        %1737 = vmatpush1.msra.mxu0 0.0
        %1738 = vmatprep.mubr.f32.mxu0 0.0
        %1739 = vmatmul.mubr.f32.gmra.mrb[0].mxu0 %v1568
        %v1740 = vpop.f32.mrb[0].mxu0
        %v1741 = vadd.f32 0.0, %v1740
        %v1742 = vpop.f32.mrb[0].mxu0
        %1743 = vmatprep.mubr.f32.mxu0 0.0
        %1744 = vmatmul.mubr.f32.gmra.mrb[0].mxu0 %v1571
        %v1745 = vpop.f32.mrb[0].mxu0
        %v1746 = vadd.f32 0.0, %v1745
        %v1747 = vpop.f32.mrb[0].mxu0
        %1748 = vdwg.mxu0
        %v1749 = vadd.f32 %v1667, %v1741
        %v1750 = vadd.f32 %v1668, %v1746
        %s1751 = scalar_lea.vmem %s5, 64
        %v1752 = vld [vmem:[%s1751] sm:$0xff]
        %v1753 = vld [vmem:[%s1751 + $0x8] sm:$0xff]
        %v1754 = vld [vmem:[%s1751 + $0x10] sm:$0xff]
        %v1755 = vld [vmem:[%s1751 + $0x18] sm:$0xff]
        %1756 = vmatprep.subr.mxu0 0.0
        %1757 = vmatpush1.msra.mxu0 %v1752
        %1758 = vmatprep.subr.mxu0 0.0
        %1759 = vmatpush1.msra.mxu0 %v1753
        %1760 = vmatprep.subr.mxu0 0.0
        %1761 = vmatpush1.msra.mxu0 %v1754
        %1762 = vmatprep.subr.mxu0 0.0
        %1763 = vmatpush1.msra.mxu0 %v1755
        %1764 = vmatprep.subr.mxu0 0.0
        %1765 = vmatpush1.msra.mxu0 0.0
        %1766 = vmatprep.subr.mxu0 0.0
        %1767 = vmatpush1.msra.mxu0 0.0
        %1768 = vmatprep.subr.mxu0 0.0
        %1769 = vmatpush1.msra.mxu0 0.0
        %1770 = vmatprep.subr.mxu0 0.0
        %1771 = vmatpush1.msra.mxu0 0.0
        %1772 = vmatprep.subr.mxu0 0.0
        %1773 = vmatpush1.msra.mxu0 0.0
        %1774 = vmatprep.subr.mxu0 0.0
        %1775 = vmatpush1.msra.mxu0 0.0
        %1776 = vmatprep.subr.mxu0 0.0
        %1777 = vmatpush1.msra.mxu0 0.0
        %1778 = vmatprep.subr.mxu0 0.0
        %1779 = vmatpush1.msra.mxu0 0.0
        %1780 = vmatprep.subr.mxu0 0.0
        %1781 = vmatpush1.msra.mxu0 0.0
        %1782 = vmatprep.subr.mxu0 0.0
        %1783 = vmatpush1.msra.mxu0 0.0
        %1784 = vmatprep.subr.mxu0 0.0
        %1785 = vmatpush1.msra.mxu0 0.0
        %1786 = vmatprep.subr.mxu0 0.0
        %1787 = vmatpush1.msra.mxu0 0.0
        %1788 = vmatprep.subr.mxu0 0.0
        %1789 = vmatpush1.msra.mxu0 0.0
        %1790 = vmatprep.subr.mxu0 0.0
        %1791 = vmatpush1.msra.mxu0 0.0
        %1792 = vmatprep.subr.mxu0 0.0
        %1793 = vmatpush1.msra.mxu0 0.0
        %1794 = vmatprep.subr.mxu0 0.0
        %1795 = vmatpush1.msra.mxu0 0.0
        %1796 = vmatprep.subr.mxu0 0.0
        %1797 = vmatpush1.msra.mxu0 0.0
        %1798 = vmatprep.subr.mxu0 0.0
        %1799 = vmatpush1.msra.mxu0 0.0
        %1800 = vmatprep.subr.mxu0 0.0
        %1801 = vmatpush1.msra.mxu0 0.0
        %1802 = vmatprep.subr.mxu0 0.0
        %1803 = vmatpush1.msra.mxu0 0.0
        %1804 = vmatprep.subr.mxu0 0.0
        %1805 = vmatpush1.msra.mxu0 0.0
        %1806 = vmatprep.subr.mxu0 0.0
        %1807 = vmatpush1.msra.mxu0 0.0
        %1808 = vmatprep.subr.mxu0 0.0
        %1809 = vmatpush1.msra.mxu0 0.0
        %1810 = vmatprep.subr.mxu0 0.0
        %1811 = vmatpush1.msra.mxu0 0.0
        %1812 = vmatprep.subr.mxu0 0.0
        %1813 = vmatpush1.msra.mxu0 0.0
        %1814 = vmatprep.subr.mxu0 0.0
        %1815 = vmatpush1.msra.mxu0 0.0
        %1816 = vmatprep.subr.mxu0 0.0
        %1817 = vmatpush1.msra.mxu0 0.0
        %1818 = vmatprep.subr.mxu0 0.0
        %1819 = vmatpush1.msra.mxu0 0.0
        %1820 = vmatprep.mubr.f32.mxu0 0.0
        %1821 = vmatmul.mubr.f32.gmra.mrb[0].mxu0 %v1568
        %v1822 = vpop.f32.mrb[0].mxu0
        %v1823 = vadd.f32 0.0, %v1822
        %v1824 = vpop.f32.mrb[0].mxu0
        %1825 = vmatprep.mubr.f32.mxu0 0.0
        %1826 = vmatmul.mubr.f32.gmra.mrb[0].mxu0 %v1571
        %v1827 = vpop.f32.mrb[0].mxu0
        %v1828 = vadd.f32 0.0, %v1827
        %v1829 = vpop.f32.mrb[0].mxu0
        %1830 = vdwg.mxu0
        %1831 = vst.msk [vmem:[#allocation3 + $0x8] sm:$0xff] %vm1648, %v1823
        %1832 = vst.msk [vmem:[#allocation3 + $0x10] sm:$0xff] %vm1648, %v1828
        %v1833 = vld [vmem:[#allocation3 + $0x9] sm:$0xff]
        %v1834 = vld [vmem:[#allocation3 + $0x11] sm:$0xff]
        %v1835 = vadd.s32 %v413, 1
        %v1836 = vadd.s32 %v414, 1
        %vm1837 = vcmp.ge.s32.totalorder %v1835, 0
        %vm1838 = vcmp.ge.s32.totalorder %v1836, 0
        %vm1839 = vcmp.lt.s32.totalorder %v1835, 8
        %vm1840 = vcmp.lt.s32.totalorder %v1836, 8
        %vm1841 = vmand %vm1837, %vm1839
        %vm1842 = vmand %vm1838, %vm1840
        %v1843 = vsel %vm1841, 1, 0
        %v1844 = vsel %vm1842, 1, 0
        %vm1845 = vcmp.eq.s32.totalorder %v1843, 1
        %vm1846 = vcmp.eq.s32.totalorder %v1844, 1
        %v1847 = vsel %vm1845, %v1833, 0.0
        %v1848 = vsel %vm1846, %v1834, 0.0
        %v1849 = vadd.f32 %v1749, %v1847
        %v1850 = vadd.f32 %v1750, %v1848
        %v1851 = vld [vmem:[%s6] sm:$0x1]
        %v1853 = vlaneseq
        %v1854 = vshrl.u32 %v1853, 7
        %v1855 = vsub.s32 0, %v1854
        %v1856 = vrot.slane %v1851, %v1855
        %v1858 = vadd.f32 %v1849, %v1856
        %v1859 = vadd.f32 %v1850, %v1856
        %v1860 = vmax.f32 %v1858, 0.0
        %v1861 = vmax.f32 %v1859, 0.0
        %v1862 = vld [vmem:[%s7] sm:$0xff]
        %v1863 = vld [vmem:[%s7 + $0x8] sm:$0xff]
        %v1864 = vld [vmem:[%s7 + $0x10] sm:$0xff]
        %v1865 = vld [vmem:[%s7 + $0x18] sm:$0xff]
        %v1866 = vld [vmem:[%s7 + $0x20] sm:$0xff]
        %v1867 = vld [vmem:[%s7 + $0x28] sm:$0xff]
        %v1868 = vld [vmem:[%s7 + $0x30] sm:$0xff]
        %v1869 = vld [vmem:[%s7 + $0x38] sm:$0xff]
        %v1870 = vlaneseq
        %v1871 = vshrl.u32 %v1870, 7
        %v1872 = vsub.s32 3, %v1871
        %v1873 = vrot.slane %v403, %v1872
        %v1875 = vsel %vm1648, %v1860, 0
        %v1878 = vsel %vm1648, %v1861, 0
        %1880 = vmatprep.subr.mxu0 0.0
        %1881 = vmatpush1.msra.mxu0 %v1862
        %1882 = vmatprep.subr.mxu0 0.0
        %1883 = vmatpush1.msra.mxu0 %v1863
        %1884 = vmatprep.subr.mxu0 0.0
        %1885 = vmatpush1.msra.mxu0 %v1864
        %1886 = vmatprep.subr.mxu0 0.0
        %1887 = vmatpush1.msra.mxu0 %v1865
        %1888 = vmatprep.subr.mxu0 0.0
        %1889 = vmatpush1.msra.mxu0 %v1866
        %1890 = vmatprep.subr.mxu0 0.0
        %1891 = vmatpush1.msra.mxu0 %v1867
        %1892 = vmatprep.subr.mxu0 0.0
        %1893 = vmatpush1.msra.mxu0 %v1868
        %1894 = vmatprep.subr.mxu0 0.0
        %1895 = vmatpush1.msra.mxu0 %v1869
        %1896 = vmatprep.subr.mxu0 0.0
        %1897 = vmatpush1.msra.mxu0 0.0
        %1898 = vmatprep.subr.mxu0 0.0
        %1899 = vmatpush1.msra.mxu0 0.0
        %1900 = vmatprep.subr.mxu0 0.0
        %1901 = vmatpush1.msra.mxu0 0.0
        %1902 = vmatprep.subr.mxu0 0.0
        %1903 = vmatpush1.msra.mxu0 0.0
        %1904 = vmatprep.subr.mxu0 0.0
        %1905 = vmatpush1.msra.mxu0 0.0
        %1906 = vmatprep.subr.mxu0 0.0
        %1907 = vmatpush1.msra.mxu0 0.0
        %1908 = vmatprep.subr.mxu0 0.0
        %1909 = vmatpush1.msra.mxu0 0.0
        %1910 = vmatprep.subr.mxu0 0.0
        %1911 = vmatpush1.msra.mxu0 0.0
        %1912 = vmatprep.subr.mxu0 0.0
        %1913 = vmatpush1.msra.mxu0 0.0
        %1914 = vmatprep.subr.mxu0 0.0
        %1915 = vmatpush1.msra.mxu0 0.0
        %1916 = vmatprep.subr.mxu0 0.0
        %1917 = vmatpush1.msra.mxu0 0.0
        %1918 = vmatprep.subr.mxu0 0.0
        %1919 = vmatpush1.msra.mxu0 0.0
        %1920 = vmatprep.subr.mxu0 0.0
        %1921 = vmatpush1.msra.mxu0 0.0
        %1922 = vmatprep.subr.mxu0 0.0
        %1923 = vmatpush1.msra.mxu0 0.0
        %1924 = vmatprep.subr.mxu0 0.0
        %1925 = vmatpush1.msra.mxu0 0.0
        %1926 = vmatprep.subr.mxu0 0.0
        %1927 = vmatpush1.msra.mxu0 0.0
        %1928 = vmatprep.subr.mxu0 0.0
        %1929 = vmatpush1.msra.mxu0 0.0
        %1930 = vmatprep.subr.mxu0 0.0
        %1931 = vmatpush1.msra.mxu0 0.0
        %1932 = vmatprep.subr.mxu0 0.0
        %1933 = vmatpush1.msra.mxu0 0.0
        %1934 = vmatprep.subr.mxu0 0.0
        %1935 = vmatpush1.msra.mxu0 0.0
        %1936 = vmatprep.subr.mxu0 0.0
        %1937 = vmatpush1.msra.mxu0 0.0
        %1938 = vmatprep.subr.mxu0 0.0
        %1939 = vmatpush1.msra.mxu0 0.0
        %1940 = vmatprep.subr.mxu0 0.0
        %1941 = vmatpush1.msra.mxu0 0.0
        %1942 = vmatprep.subr.mxu0 0.0
        %1943 = vmatpush1.msra.mxu0 0.0
        %1944 = vmatprep.mubr.f32.mxu0 0.0
        %1945 = vmatmul.mubr.f32.gmra.mrb[0].mxu0 %v1875
        %v1946 = vpop.f32.mrb[0].mxu0
        %v1947 = vadd.f32 %v1873, %v1946
        %v1948 = vpop.f32.mrb[0].mxu0
        %1949 = vmatprep.mubr.f32.mxu0 0.0
        %1950 = vmatmul.mubr.f32.gmra.mrb[0].mxu0 %v1878
        %v1951 = vpop.f32.mrb[0].mxu0
        %v1952 = vadd.f32 %v1873, %v1951
        %v1953 = vpop.f32.mrb[0].mxu0
        %1954 = vdwg.mxu0
        %v1955 = vadd.f32 %v1947, %v1561
        %v1956 = vadd.f32 %v1952, %v1562
        %v1957 = vsel %vm446, %v1955, 0.0
        %1958 = vadd.xlane.f32.xlu0 %v1957
        %v1959 = vpop.xlane.xlu0 %1958
        %v1960 = vsel %vm446, %v1956, 0.0
        %1961 = vadd.xlane.f32.xlu0 %v1960
        %v1962 = vpop.xlane.xlu0 %1961
        %v1963 = vmul.f32 %v1959, %v1528
        %v1964 = vmul.f32 %v1962, %v1528
        %v1965 = vsub.f32 %v1955, %v1963
        %v1966 = vsub.f32 %v1956, %v1964
        %v1967 = vmul.f32 %v1965, %v1965
        %v1968 = vmul.f32 %v1966, %v1966
        %v1969 = vsel %vm446, %v1967, 0.0
        %1970 = vadd.xlane.f32.xlu0 %v1969
        %v1971 = vpop.xlane.xlu0 %1970
        %v1972 = vsel %vm446, %v1968, 0.0
        %1973 = vadd.xlane.f32.xlu0 %v1972
        %v1974 = vpop.xlane.xlu0 %1973
        %v1975 = vmul.f32 %v1971, %v1528
        %v1976 = vmul.f32 %v1974, %v1528
        %v1977 = vadd.f32 %v1975, 1e-05
        %v1978 = vadd.f32 %v1976, 1e-05
        %v1979 = vrsqrt.pop %v1977
        %v1980 = vrsqrt.pop %v1978
        %v1981 = vmul.f32 %v1965, %v1979
        %v1982 = vmul.f32 %v1966, %v1980
        %v1983 = vlaneseq
        %v1984 = vshrl.u32 %v1983, 7
        %v1985 = vsub.s32 4, %v1984
        %v1986 = vrot.slane %v403, %v1985
        %v1987 = vmul.f32 %v1981, %v1986
        %v1988 = vmul.f32 %v1982, %v1986
        %v1989 = vlaneseq
        %v1990 = vshrl.u32 %v1989, 7
        %v1991 = vsub.s32 5, %v1990
        %v1992 = vrot.slane %v403, %v1991
        %v1993 = vadd.f32 %v1987, %v1992
        %v1994 = vadd.f32 %v1988, %v1992
        %v1995 = vmul.f32 %v1993, %v433
        %v1996 = vmul.f32 %v1994, %v434
        %1997 = vst.msk [vmem:[%s390] sm:$0xff] %vm446, %v1995
        %1998 = vst.msk [vmem:[%s390 + $0x8] sm:$0xff] %vm446, %v1996
        %s1999 = sand.u32 %s219, 1
        %s2000 = scalar_lea.sflag [#allocation8], %s1999
        %s2001 = sand.u32 %s219, 1
        %s2002 = smul.addr %s2001, 16
        %s2003 = scalar_lea.vmem [#allocation12], %s2002
        %s2004 = sand.u32 %s245, 1
        %s2005 = scalar_lea.sflag [#allocation14], %s2004
        %s2006 = sand.u32 %s245, 1
        %s2007 = smul.addr %s2006, 16
        %s2008 = scalar_lea.vmem [#allocation13], %s2007
        // Predicated region
        $region65: #{tpu_custom_call.1} parent=51 // pred_check
          %p2009 = pneg %p229
        $region66: #{tpu_custom_call.1} parent=51 // pred_check_branch
          %2011 = sbr.rel (%p2009) target = $region68
        $region67: #{tpu_custom_call.1} parent=51 // pred_region
          %s2012 = smul.u32 2, %s38
          %s2014 = ssub.s32 256, 256
          %2015 = vsyncadd %s2000, %s2014
          %s2016 = smul.addr %s2012, 128
          %s2017 = scalar_lea.hbm %s9, %s2016
          %s2018 = sshll.u32 %s2003, 4
          %s2019 = int_to_ptr.vmem [resolvable:$true] %s2018
          %2024 = dma.vmem_to_hbm [thread:$0]  %s2019, 256, %s2017, %s2000, 128, 128, 8
        $region68: #{tpu_custom_call.1} parent=51 // pred_fallthru
          _
        // Predicated region
        $region69: #{tpu_custom_call.1} parent=51 // pred_check
          %p2025 = pneg %p255
        $region70: #{tpu_custom_call.1} parent=51 // pred_check_branch
          %2027 = sbr.rel (%p2025) target = $region72
        $region71: #{tpu_custom_call.1} parent=51 // pred_region
          #allocation16 [shape = 'u32[6]{0}', space=smem, size = 0x18, scoped, tag = 'DMA stride descriptor']
          %s2028 = smul.u32 2, %s38
          %s2030 = ssub.s32 256, 256
          %2031 = vsyncadd %s2005, %s2030
          %s2032 = smul.addr %s2028, 64
          %s2033 = scalar_lea.hbm %s10, %s2032
          %s2035 = sshll.u32 1, 14
          %s2036 = sxor.u32 4294967295, %s2035
          %s2039 = sshll.u32 7, 18
          %s2040 = sxor.u32 4294967295, %s2039
          %s2041 = sand.u32 0, %s2040
          %s2043 = sor.u32 %s2041, 0
          %s2045 = sshll.u32 3, 24
          %s2046 = sxor.u32 4294967295, %s2045
          %s2047 = sand.u32 %s2043, %s2046
          %s2049 = sor.u32 %s2047, 0
          %s2050 = sshll.u32 %s2008, 4
          %s2051 = int_to_ptr.vmem [resolvable:$true] %s2050
          %2057 = sst [smem:[#allocation16]] 128
          %s2058 = scalar_lea.smem [#allocation16], 1
          %2059 = sst [smem:[%s2058]] 256
          %s2060 = scalar_lea.smem [#allocation16], 2
          %2061 = sst [smem:[%s2060]] 2
          %s2062 = scalar_lea.smem [#allocation16], 3
          %2063 = sst [smem:[%s2062]] 64
          %s2064 = scalar_lea.smem [#allocation16], 4
          %2065 = sst [smem:[%s2064]] 64
          %s2066 = scalar_lea.smem [#allocation16], 5
          %2067 = sst [smem:[%s2066]] 4
          %2069 = dma.general %s2051, 256, %s2033, %s2005, [#allocation15], [#allocation16], %s2049, 0
        $region72: #{tpu_custom_call.1} parent=51 // pred_fallthru
          _
      $region52: #{tpu_custom_call.1} parent=5 // pred_fallthru
        _
      %p2070 = scmp.le.s32.totalorder 2, %s33
      // Predicated region
      $region73: #{tpu_custom_call.1} parent=5 // pred_check
        %p2071 = pneg %p2070
      $region74: #{tpu_custom_call.1} parent=5 // pred_check_branch
        %2073 = sbr.rel (%p2071) target = $region76
      $region75: #{tpu_custom_call.1} parent=5 // pred_region
        %s2074 = ssub.s32 %s33, 2
        // Predicated region
        $region77: #{tpu_custom_call.1} parent=75 // pred_check
          %p2075 = pneg %p235
        $region78: #{tpu_custom_call.1} parent=75 // pred_check_branch
          %2077 = sbr.rel (%p2075) target = $region80
        $region79: #{tpu_custom_call.1} parent=75 // pred_region
          %s2078 = sand.u32 %s220, 1
          %s2079 = scalar_lea.sflag [#allocation8], %s2078
          %s2080 = sand.u32 %s220, 1
          %s2081 = smul.addr %s2080, 16
          %s2082 = scalar_lea.vmem [#allocation12], %s2081
          %2083 = dma.done %s2079, 256
        $region80: #{tpu_custom_call.1} parent=75 // pred_fallthru
          _
        // Predicated region
        $region81: #{tpu_custom_call.1} parent=75 // pred_check
          %p2084 = pneg %p261
        $region82: #{tpu_custom_call.1} parent=75 // pred_check_branch
          %2086 = sbr.rel (%p2084) target = $region84
        $region83: #{tpu_custom_call.1} parent=75 // pred_region
          %s2087 = sand.u32 %s246, 1
          %s2088 = scalar_lea.sflag [#allocation14], %s2087
          %s2089 = sand.u32 %s246, 1
          %s2090 = smul.addr %s2089, 16
          %s2091 = scalar_lea.vmem [#allocation13], %s2090
          %2092 = dma.done %s2088, 256
        $region84: #{tpu_custom_call.1} parent=75 // pred_fallthru
          _
      $region76: #{tpu_custom_call.1} parent=5 // pred_fallthru
        _
    $region6: #{tpu_custom_call.1} parent=1 // loop_footer
      %s37 = sadd.s32 1, %s33
    $region7: #{tpu_custom_call.1} parent=1 // loop_footer_branch
      %32 = sbr.rel target = $region3
    $region8: #{tpu_custom_call.1} parent=1 // loop_exit
      _
    %2093 = vsyncpa [#allocation7], 1
    %s2094 = scalar_lea.sflag [#allocation7], 1
    %2095 = vsyncpa %s2094, 1
    %2096 = vsyncpa [#allocation10], 1
    %2097 = vsyncpa [#allocation8], 1
    %s2098 = scalar_lea.sflag [#allocation8], 1
    %2099 = vsyncpa %s2098, 1
    %2100 = vsyncpa [#allocation14], 1
    %s2101 = scalar_lea.sflag [#allocation14], 1
    %2102 = vsyncpa %s2101, 1

</llo_original>
